<compile_context>
chip_gen: v7x
topology: tpu7x:2x2x1
jax: 0.10.0
libtpu: 0.0.40
codegen_flags: <defaults>
</compile_context>

<pallas_src>
import functools

import jax
import jax.numpy as jnp
from jax.experimental import pallas as pl
from jax.experimental.pallas import tpu as pltpu

LEAKY_RELU_SLOPE = 0.3
LN_EPS = 1e-5


def _round_up(n, m):
    return ((n + m - 1) // m) * m


def _prosody_kernel(lens_ref,            # SMEM (B,)  int32   (scalar prefetch)
                    x_ref,               # VMEM (bpt, Tp, Dp) matmul dtype
                    w_ref,               # VMEM (2, Dp, Dp)   matmul dtype
                    p_ref,               # VMEM (2, PR, Dp)   f32 packed params
                    o_ref,               # VMEM (bpt, Tp, Dp) out dtype
                    *, kernel_size, conv_pad, d_true, t_true, t_pad, bpt,
                    need_tap_masks, need_row_mask, need_lane_mask,
                    leaky_slope, matmul_dtype):
    Dp = x_ref.shape[-1]
    tile = pl.program_id(0)

    # Batch-local time index (tiny (Tp, 1) iota; cheap to keep around).
    t_idx = jax.lax.broadcasted_iota(jnp.int32, (t_pad, 1), 0)

    if need_lane_mask:
        lane = jax.lax.broadcasted_iota(jnp.int32, (1, Dp), 1)
        lane_valid = (lane < d_true).astype(jnp.float32)
    inv_d = 1.0 / d_true

    def block(y, idx):
        p = p_ref[idx]                                   # (PR, Dp) f32
        pw_b, dw_b, ln_g, ln_b = p[0:1], p[1:2], p[2:3], p[3:4]

        # Pointwise 1x1 conv == channel matmul on the MXU (f32 accumulate).
        y = jnp.dot(y.astype(matmul_dtype), w_ref[idx],
                    preferred_element_type=jnp.float32) + pw_b

        # Single row-zeroing select: padded time rows become exact zeros, so
        # the depthwise taps see the conv's zero time-padding (the zero gap is
        # >= conv_pad rows, so rolls can never leak valid data across rows).
        if need_row_mask:
            y = jnp.where(t_idx < t_true, y, 0.0)

        # Depthwise conv over time: K sublane rotations (XLU) + per-channel taps.
        acc = None
        for k in range(kernel_size):
            shift = (conv_pad - k) % t_pad
            z = pltpu.roll(y, shift=shift, axis=0) if shift else y
            if need_tap_masks:
                # Only when the zero gap is < conv_pad (no-copy fast path):
                # kill taps whose source falls outside [0, T).
                src = t_idx + (k - conv_pad)
                z = jnp.where(jnp.logical_and(src >= 0, src < t_true), z, 0.0)
            term = z * p[4 + k:5 + k]
            acc = term if acc is None else acc + term
        y = acc + dw_b

        # LeakyReLU.
        y = jnp.where(y >= 0, y, leaky_slope * y)

        # LayerNorm over the true channel count (biased variance, eps=1e-5).
        if need_lane_mask:
            mu = jnp.sum(y * lane_valid, axis=-1, keepdims=True) * inv_d
            diff = (y - mu) * lane_valid
        else:
            mu = jnp.sum(y, axis=-1, keepdims=True) * inv_d
            diff = y - mu
        var = jnp.sum(diff * diff, axis=-1, keepdims=True) * inv_d
        y = diff * jax.lax.rsqrt(var + LN_EPS)
        # TODO(synk): Dropout is identity here (inference); training-mode RNG
        # dropout is not implemented in-kernel.
        return y * ln_g + ln_b

    for j in range(bpt):                 # static unroll; bpt is kept small
        y = block(x_ref[j], 0)
        y = block(y, 1)
        # masked_fill(mask, 0.0): zero positions at/after this sequence's length.
        y = jnp.where(t_idx < lens_ref[tile * bpt + j], y, 0.0)
        o_ref[j] = y.astype(o_ref.dtype)


def phoneme_prosody_predictor(x, lengths, params, *, kernel_size,
                              leaky_slope=LEAKY_RELU_SLOPE,
                              matmul_dtype=jnp.bfloat16,
                              out_dtype=None,
                              rows_per_tile_target=1024,
                              single_buffer_consts=True):
    """Forward pass of PhonemeProsodyPredictor (eval mode).

    x:       [B, T, D] activations; carried through HBM as `matmul_dtype`.
    lengths: [B] int, valid length per sequence (PyTorch mask == t >= length).
    Returns  [B, T, D] in `out_dtype` (default: matmul_dtype, i.e. bf16).
    """
    assert kernel_size % 2 == 1, "module semantics require an odd kernel_size"
    B, T, D = x.shape
    conv_pad = (kernel_size - 1) // 2
    out_dtype = matmul_dtype if out_dtype is None else out_dtype

    fast_path = (T % 8 == 0) and (D % 128 == 0)
    if fast_path:
        # No wrapper-side pad/reshape passes over the activations.
        Tp, Dp = T, D
        x_in = x if x.dtype == matmul_dtype else x.astype(matmul_dtype)
    else:
        Dp = _round_up(D, 128)
        Tp = _round_up(T, 8)
        while Tp - T < conv_pad:         # zero gap >= conv_pad between rows
            Tp += 8
        x_in = jnp.pad(x.astype(matmul_dtype),
                       ((0, 0), (0, Tp - T), (0, Dp - D)))

    gap = Tp - T
    need_tap_masks = (conv_pad > 0) and (gap < conv_pad)
    need_row_mask = (conv_pad > 0) and (not need_tap_masks) and (Tp > T)
    need_lane_mask = (Dp > D)

    # Whole sequences per row tile; keep num_tiles >= 2 whenever B >= 2 so the
    # single "parallel" grid axis can be split across v7x's two TensorCores.
    bpt = 1
    for cand in range(1, B + 1):
        if B % cand:
            continue
        if cand * Tp > max(rows_per_tile_target, Tp):
            continue
        if B // cand >= 2 or B == 1:
            bpt = cand
    num_tiles = B // bpt
    R = bpt * Tp

    # Pack small per-block params into one (2, PR, Dp) array (2 DMAs total).
    PR = _round_up(4 + kernel_size, 8)

    def pack_block(pw_b, dw_b, ln_g, ln_b, dw_w):
        rows = jnp.concatenate(
            [jnp.reshape(pw_b, (1, D)), jnp.reshape(dw_b, (1, D)),
             jnp.reshape(ln_g, (1, D)), jnp.reshape(ln_b, (1, D)),
             jnp.reshape(dw_w, (kernel_size, D))], axis=0).astype(jnp.float32)
        return jnp.pad(rows, ((0, PR - (4 + kernel_size)), (0, Dp - D)))

    p_all = jnp.stack(
        [pack_block(params["pw1_b"], params["dw1_b"], params["ln1_g"],
                    params["ln1_b"], params["dw1_w"]),
         pack_block(params["pw2_b"], params["dw2_b"], params["ln2_g"],
                    params["ln2_b"], params["dw2_w"])], axis=0)
    w_all = jnp.stack(
        [jnp.pad(params["pw1_w"], ((0, Dp - D), (0, Dp - D))),
         jnp.pad(params["pw2_w"], ((0, Dp - D), (0, Dp - D)))],
        axis=0).astype(matmul_dtype)
    lens32 = jnp.asarray(lengths, jnp.int32)

    # VMEM limit: double-buffered in/out tiles + resident weights + headroom
    # for the compiler's f32 temporaries.
    in_b = jnp.dtype(matmul_dtype).itemsize
    o_b = jnp.dtype(out_dtype).itemsize
    est = (2 * R * Dp * in_b + 2 * R * Dp * o_b
           + 2 * Dp * Dp * in_b + 2 * PR * Dp * 4
           + 8 * R * Dp * 4)
    vmem_limit = int(min(128 * 1024 * 1024, max(32 * 1024 * 1024, est)))

    kernel = functools.partial(
        _prosody_kernel, kernel_size=kernel_size, conv_pad=conv_pad,
        d_true=D, t_true=T, t_pad=Tp, bpt=bpt,
        need_tap_masks=need_tap_masks, need_row_mask=need_row_mask,
        need_lane_mask=need_lane_mask,
        leaky_slope=leaky_slope, matmul_dtype=matmul_dtype)

    def build(const_mode):
        def const_spec(shape):
            if const_mode is None:
                return pl.BlockSpec(shape, lambda i, lens: (0,) * len(shape))
            return pl.BlockSpec(shape, lambda i, lens: (0,) * len(shape),
                                pipeline_mode=const_mode)

        return pl.pallas_call(
            kernel,
            out_shape=jax.ShapeDtypeStruct((B, Tp, Dp), out_dtype),
            grid_spec=pltpu.PrefetchScalarGridSpec(
                num_scalar_prefetch=1,
                grid=(num_tiles,),
                in_specs=[
                    pl.BlockSpec((bpt, Tp, Dp), lambda i, lens: (i, 0, 0)),
                    const_spec((2, Dp, Dp)),
                    const_spec((2, PR, Dp)),
                ],
                out_specs=pl.BlockSpec((bpt, Tp, Dp), lambda i, lens: (i, 0, 0)),
            ),
            compiler_params=pltpu.CompilerParams(
                dimension_semantics=("parallel",),
                vmem_limit_bytes=vmem_limit,
            ),
        )

    args = (lens32, x_in, w_all, p_all)
    if single_buffer_consts:
        # Grid-invariant operands only need one VMEM buffer; fall back if this
        # jax version rejects pl.Buffered(1).
        try:
            out = build(pl.Buffered(1))(*args)
        except Exception:
            out = build(None)(*args)
    else:
        out = build(None)(*args)

    return out if fast_path else out[:, :T, :D]


def init_params(key, d_model, kernel_size):
    ks = jax.random.split(key, 8)

    def blk(k0, k1, k2, k3):
        return dict(
            pw_w=0.1 * jax.random.normal(k0, (d_model, d_model), jnp.float32),
            pw_b=0.05 * jax.random.normal(k1, (1, d_model), jnp.float32),
            dw_w=0.2 * jax.random.normal(k2, (kernel_size, d_model), jnp.float32),
            dw_b=0.05 * jax.random.normal(k3, (1, d_model), jnp.float32),
            ln_g=jnp.ones((1, d_model), jnp.float32),
            ln_b=jnp.zeros((1, d_model), jnp.float32),
        )

    b1 = blk(*ks[0:4]); b2 = blk(*ks[4:8])
    return {
        "pw1_w": b1["pw_w"], "pw1_b": b1["pw_b"], "dw1_w": b1["dw_w"],
        "dw1_b": b1["dw_b"], "ln1_g": b1["ln_g"], "ln1_b": b1["ln_b"],
        "pw2_w": b2["pw_w"], "pw2_b": b2["pw_b"], "dw2_w": b2["dw_w"],
        "dw2_b": b2["dw_b"], "ln2_g": b2["ln_g"], "ln2_b": b2["ln_b"],
    }


def reference(x, lengths, params, *, kernel_size,
              leaky_slope=LEAKY_RELU_SLOPE, matmul_dtype=jnp.bfloat16):
    """Pure-JAX reference matching the PyTorch forward (eval mode); pointwise
    conv operands are cast to matmul_dtype to mirror the kernel's MXU dtype."""
    conv_pad = (kernel_size - 1) // 2
    T = x.shape[1]
    mask = jnp.arange(T)[None, :] >= lengths[:, None]

    def block(y, pw_w, pw_b, dw_w, dw_b, ln_g, ln_b):
        y = jnp.einsum("btd,de->bte", y.astype(matmul_dtype),
                       pw_w.astype(matmul_dtype),
                       preferred_element_type=jnp.float32) + pw_b
        yp = jnp.pad(y, ((0, 0), (conv_pad, conv_pad), (0, 0)))
        out = sum(yp[:, k:k + T, :] * dw_w[k] for k in range(kernel_size)) + dw_b
        out = jnp.where(out >= 0, out, leaky_slope * out)
        mu = out.mean(-1, keepdims=True)
        var = ((out - mu) ** 2).mean(-1, keepdims=True)
        return (out - mu) / jnp.sqrt(var + LN_EPS) * ln_g + ln_b

    y = block(x, params["pw1_w"], params["pw1_b"], params["dw1_w"],
              params["dw1_b"], params["ln1_g"], params["ln1_b"])
    y = block(y, params["pw2_w"], params["pw2_b"], params["dw2_w"],
              params["dw2_b"], params["ln2_g"], params["ln2_b"])
    return jnp.where(mask[..., None], 0.0, y)


if __name__ == "__main__":
    key = jax.random.PRNGKey(0)

    def run_case(B, T, D, K, lengths, kx, kp):
        x = jax.random.normal(kx, (B, T, D), jnp.float32)
        params = init_params(kp, D, K)
        out = phoneme_prosody_predictor(x, lengths, params, kernel_size=K)
        out = jax.block_until_ready(out)
        assert out.shape == (B, T, D)
        ref = reference(x, lengths, params, kernel_size=K)
        out_f = out.astype(jnp.float32)
        # bf16 output rounding => loose-ish tolerance; structural errors are O(1).
        assert jnp.allclose(out_f, ref, atol=5e-2, rtol=5e-2), (
            f"mismatch vs reference for B={B} T={T} D={D} K={K}")
        # Positions at/after each sequence's length must be exactly zero.
        t = jnp.arange(T)[None, :, None]
        assert bool(jnp.all(jnp.where(t >= lengths[:, None, None], out_f, 0.0) == 0.0))

    k1, k2, k3, k4 = jax.random.split(key, 4)
    # Padded path: D=32 (lane-pad to 128), T padded 16 -> 24 (gap >= conv_pad,
    # single row-zero mask per block).
    run_case(2, 16, 32, 5, jnp.array([16, 10], jnp.int32), k1, k2)
    # Fast path: no wrapper pad (T % 8 == 0, D % 128 == 0), per-tap masks in-kernel.
    run_case(2, 16, 128, 5, jnp.array([12, 16], jnp.int32), k3, k4)

    print("KERNEL_OK")
</pallas_src>

<mosaic_0001>
module attributes {stable_mosaic.version = 11 : i64} {
  func.func @_prosody_kernel(%arg0: i32, %arg1: memref<2xi32, #tpu.memory_space<smem>>, %arg2: memref<1x24x128xbf16, #tpu.memory_space<vmem>>, %arg3: memref<2x128x128xbf16, #tpu.memory_space<vmem>>, %arg4: memref<2x16x128xf32, #tpu.memory_space<vmem>>, %arg5: memref<1x24x128xbf16, #tpu.memory_space<vmem>>) attributes {dimension_semantics = [#tpu.dimension_semantics<parallel>], iteration_bounds = array<i64: 2>, scalar_prefetch = 1 : i64, scratch_operands = 0 : i64, tpu.core_type = #tpu.core_type<tc>, window_params = [{transform_indices = @transform_0, window_bounds = array<i64: 1, 24, 128>}, {pipeline_mode = #tpu.pipeline_mode<synchronous>, transform_indices = @transform_1, window_bounds = array<i64: 2, 128, 128>}, {pipeline_mode = #tpu.pipeline_mode<synchronous>, transform_indices = @transform_2, window_bounds = array<i64: 2, 16, 128>}, {transform_indices = @transform_3, window_bounds = array<i64: 1, 24, 128>}]} {
    %0 = tpu.iota {dimensions = array<i32: 0>} : vector<24x1xi32>
    %1 = tpu.iota {dimensions = array<i32: 1>} : vector<1x128xi32>
    %c32_i32 = arith.constant 32 : i32
    %2 = vector.broadcast %c32_i32 : i32 to vector<1x128xi32>
    %3 = arith.cmpi slt, %1, %2 : vector<1x128xi32>
    %4 = arith.extui %3 : vector<1x128xi1> to vector<1x128xi32>
    %5 = arith.sitofp %4 : vector<1x128xi32> to vector<1x128xf32>
    %c0 = arith.constant 0 : index
    %c0_0 = arith.constant 0 : index
    %c0_1 = arith.constant 0 : index
    %6 = vector.load %arg2[%c0, %c0_0, %c0_1] : memref<1x24x128xbf16, #tpu.memory_space<vmem>>, vector<1x24x128xbf16>
    %7 = vector.shape_cast %6 : vector<1x24x128xbf16> to vector<24x128xbf16>
    %c0_2 = arith.constant 0 : index
    %c0_3 = arith.constant 0 : index
    %c0_4 = arith.constant 0 : index
    %8 = vector.load %arg4[%c0_2, %c0_3, %c0_4] : memref<2x16x128xf32, #tpu.memory_space<vmem>>, vector<1x16x128xf32>
    %9 = vector.shape_cast %8 : vector<1x16x128xf32> to vector<16x128xf32>
    %10 = vector.extract_strided_slice %9 {offsets = [0, 0], sizes = [1, 128], strides = [1, 1]} : vector<16x128xf32> to vector<1x128xf32>
    %11 = vector.extract_strided_slice %9 {offsets = [1, 0], sizes = [1, 128], strides = [1, 1]} : vector<16x128xf32> to vector<1x128xf32>
    %12 = vector.extract_strided_slice %9 {offsets = [2, 0], sizes = [1, 128], strides = [1, 1]} : vector<16x128xf32> to vector<1x128xf32>
    %13 = vector.extract_strided_slice %9 {offsets = [3, 0], sizes = [1, 128], strides = [1, 1]} : vector<16x128xf32> to vector<1x128xf32>
    %c0_5 = arith.constant 0 : index
    %c0_6 = arith.constant 0 : index
    %c0_7 = arith.constant 0 : index
    %14 = vector.load %arg3[%c0_5, %c0_6, %c0_7] : memref<2x128x128xbf16, #tpu.memory_space<vmem>>, vector<1x128x128xbf16>
    %15 = vector.shape_cast %14 : vector<1x128x128xbf16> to vector<128x128xbf16>
    %cst = arith.constant dense<0.000000e+00> : vector<24x128xf32>
    %16 = tpu.matmul %7, %15, %cst {dimension_numbers = #tpu.dot_dimension_numbers<[1], [0], [0], [1], [0, 0, 1, 1], [], []>} : vector<24x128xbf16>, vector<128x128xbf16>, vector<24x128xf32> -> vector<24x128xf32>
    %17 = vector.broadcast %10 : vector<1x128xf32> to vector<24x128xf32>
    %18 = arith.addf %16, %17 : vector<24x128xf32>
    %c16_i32 = arith.constant 16 : i32
    %19 = vector.broadcast %c16_i32 : i32 to vector<24x1xi32>
    %20 = arith.cmpi slt, %0, %19 : vector<24x1xi32>
    %cst_8 = arith.constant 0.000000e+00 : f32
    %21 = vector.shape_cast %20 : vector<24x1xi1> to vector<24x1xi1>
    %22 = vector.broadcast %21 : vector<24x1xi1> to vector<24x128xi1>
    %23 = vector.broadcast %cst_8 : f32 to vector<24x128xf32>
    %24 = arith.select %22, %18, %23 : vector<24x128xi1>, vector<24x128xf32>
    %c2_i32 = arith.constant 2 : i32
    %25 = tpu.dynamic_rotate %24 by %c2_i32 dim 0 : vector<24x128xf32>, i32 -> vector<24x128xf32>
    %26 = vector.extract_strided_slice %9 {offsets = [4, 0], sizes = [1, 128], strides = [1, 1]} : vector<16x128xf32> to vector<1x128xf32>
    %27 = vector.broadcast %26 : vector<1x128xf32> to vector<24x128xf32>
    %28 = arith.mulf %25, %27 : vector<24x128xf32>
    %c1_i32 = arith.constant 1 : i32
    %29 = tpu.dynamic_rotate %24 by %c1_i32 dim 0 : vector<24x128xf32>, i32 -> vector<24x128xf32>
    %30 = vector.extract_strided_slice %9 {offsets = [5, 0], sizes = [1, 128], strides = [1, 1]} : vector<16x128xf32> to vector<1x128xf32>
    %31 = vector.broadcast %30 : vector<1x128xf32> to vector<24x128xf32>
    %32 = arith.mulf %29, %31 : vector<24x128xf32>
    %33 = arith.addf %28, %32 : vector<24x128xf32>
    %34 = vector.extract_strided_slice %9 {offsets = [6, 0], sizes = [1, 128], strides = [1, 1]} : vector<16x128xf32> to vector<1x128xf32>
    %35 = vector.broadcast %34 : vector<1x128xf32> to vector<24x128xf32>
    %36 = arith.mulf %24, %35 : vector<24x128xf32>
    %37 = arith.addf %33, %36 : vector<24x128xf32>
    %c23_i32 = arith.constant 23 : i32
    %38 = tpu.dynamic_rotate %24 by %c23_i32 dim 0 : vector<24x128xf32>, i32 -> vector<24x128xf32>
    %39 = vector.extract_strided_slice %9 {offsets = [7, 0], sizes = [1, 128], strides = [1, 1]} : vector<16x128xf32> to vector<1x128xf32>
    %40 = vector.broadcast %39 : vector<1x128xf32> to vector<24x128xf32>
    %41 = arith.mulf %38, %40 : vector<24x128xf32>
    %42 = arith.addf %37, %41 : vector<24x128xf32>
    %c22_i32 = arith.constant 22 : i32
    %43 = tpu.dynamic_rotate %24 by %c22_i32 dim 0 : vector<24x128xf32>, i32 -> vector<24x128xf32>
    %44 = vector.extract_strided_slice %9 {offsets = [8, 0], sizes = [1, 128], strides = [1, 1]} : vector<16x128xf32> to vector<1x128xf32>
    %45 = vector.broadcast %44 : vector<1x128xf32> to vector<24x128xf32>
    %46 = arith.mulf %43, %45 : vector<24x128xf32>
    %47 = arith.addf %42, %46 : vector<24x128xf32>
    %48 = vector.broadcast %11 : vector<1x128xf32> to vector<24x128xf32>
    %49 = arith.addf %47, %48 : vector<24x128xf32>
    %cst_9 = arith.constant 0.000000e+00 : f32
    %50 = vector.broadcast %cst_9 : f32 to vector<24x128xf32>
    %51 = arith.cmpf oge, %49, %50 : vector<24x128xf32>
    %cst_10 = arith.constant 3.000000e-01 : f32
    %52 = vector.broadcast %cst_10 : f32 to vector<24x128xf32>
    %53 = arith.mulf %52, %49 : vector<24x128xf32>
    %54 = arith.select %51, %49, %53 : vector<24x128xi1>, vector<24x128xf32>
    %55 = vector.broadcast %5 : vector<1x128xf32> to vector<24x128xf32>
    %56 = arith.mulf %54, %55 : vector<24x128xf32>
    %cst_11 = arith.constant dense<0.000000e+00> : vector<24xf32>
    %57 = vector.multi_reduction <add>, %56, %cst_11 [1] : vector<24x128xf32> to vector<24xf32>
    %58 = vector.shape_cast %57 : vector<24xf32> to vector<24x1xf32>
    %cst_12 = arith.constant 3.125000e-02 : f32
    %59 = vector.broadcast %cst_12 : f32 to vector<24x1xf32>
    %60 = arith.mulf %58, %59 : vector<24x1xf32>
    %61 = vector.broadcast %60 : vector<24x1xf32> to vector<24x128xf32>
    %62 = arith.subf %54, %61 : vector<24x128xf32>
    %63 = vector.broadcast %5 : vector<1x128xf32> to vector<24x128xf32>
    %64 = arith.mulf %62, %63 : vector<24x128xf32>
    %65 = arith.mulf %64, %64 : vector<24x128xf32>
    %cst_13 = arith.constant dense<0.000000e+00> : vector<24xf32>
    %66 = vector.multi_reduction <add>, %65, %cst_13 [1] : vector<24x128xf32> to vector<24xf32>
    %67 = vector.shape_cast %66 : vector<24xf32> to vector<24x1xf32>
    %cst_14 = arith.constant 3.125000e-02 : f32
    %68 = vector.broadcast %cst_14 : f32 to vector<24x1xf32>
    %69 = arith.mulf %67, %68 : vector<24x1xf32>
    %cst_15 = arith.constant 9.99999974E-6 : f32
    %70 = vector.broadcast %cst_15 : f32 to vector<24x1xf32>
    %71 = arith.addf %69, %70 : vector<24x1xf32>
    %72 = math.rsqrt %71 : vector<24x1xf32>
    %73 = vector.broadcast %72 : vector<24x1xf32> to vector<24x128xf32>
    %74 = arith.mulf %64, %73 : vector<24x128xf32>
    %75 = vector.broadcast %12 : vector<1x128xf32> to vector<24x128xf32>
    %76 = arith.mulf %74, %75 : vector<24x128xf32>
    %77 = vector.broadcast %13 : vector<1x128xf32> to vector<24x128xf32>
    %78 = arith.addf %76, %77 : vector<24x128xf32>
    %c1 = arith.constant 1 : index
    %c0_16 = arith.constant 0 : index
    %c0_17 = arith.constant 0 : index
    %79 = vector.load %arg4[%c1, %c0_16, %c0_17] : memref<2x16x128xf32, #tpu.memory_space<vmem>>, vector<1x16x128xf32>
    %80 = vector.shape_cast %79 : vector<1x16x128xf32> to vector<16x128xf32>
    %81 = vector.extract_strided_slice %80 {offsets = [0, 0], sizes = [1, 128], strides = [1, 1]} : vector<16x128xf32> to vector<1x128xf32>
    %82 = vector.extract_strided_slice %80 {offsets = [1, 0], sizes = [1, 128], strides = [1, 1]} : vector<16x128xf32> to vector<1x128xf32>
    %83 = vector.extract_strided_slice %80 {offsets = [2, 0], sizes = [1, 128], strides = [1, 1]} : vector<16x128xf32> to vector<1x128xf32>
    %84 = vector.extract_strided_slice %80 {offsets = [3, 0], sizes = [1, 128], strides = [1, 1]} : vector<16x128xf32> to vector<1x128xf32>
    %85 = arith.truncf %78 : vector<24x128xf32> to vector<24x128xbf16>
    %c1_18 = arith.constant 1 : index
    %c0_19 = arith.constant 0 : index
    %c0_20 = arith.constant 0 : index
    %86 = vector.load %arg3[%c1_18, %c0_19, %c0_20] : memref<2x128x128xbf16, #tpu.memory_space<vmem>>, vector<1x128x128xbf16>
    %87 = vector.shape_cast %86 : vector<1x128x128xbf16> to vector<128x128xbf16>
    %cst_21 = arith.constant dense<0.000000e+00> : vector<24x128xf32>
    %88 = tpu.matmul %85, %87, %cst_21 {dimension_numbers = #tpu.dot_dimension_numbers<[1], [0], [0], [1], [0, 0, 1, 1], [], []>} : vector<24x128xbf16>, vector<128x128xbf16>, vector<24x128xf32> -> vector<24x128xf32>
    %89 = vector.broadcast %81 : vector<1x128xf32> to vector<24x128xf32>
    %90 = arith.addf %88, %89 : vector<24x128xf32>
    %c16_i32_22 = arith.constant 16 : i32
    %91 = vector.broadcast %c16_i32_22 : i32 to vector<24x1xi32>
    %92 = arith.cmpi slt, %0, %91 : vector<24x1xi32>
    %cst_23 = arith.constant 0.000000e+00 : f32
    %93 = vector.shape_cast %92 : vector<24x1xi1> to vector<24x1xi1>
    %94 = vector.broadcast %93 : vector<24x1xi1> to vector<24x128xi1>
    %95 = vector.broadcast %cst_23 : f32 to vector<24x128xf32>
    %96 = arith.select %94, %90, %95 : vector<24x128xi1>, vector<24x128xf32>
    %c2_i32_24 = arith.constant 2 : i32
    %97 = tpu.dynamic_rotate %96 by %c2_i32_24 dim 0 : vector<24x128xf32>, i32 -> vector<24x128xf32>
    %98 = vector.extract_strided_slice %80 {offsets = [4, 0], sizes = [1, 128], strides = [1, 1]} : vector<16x128xf32> to vector<1x128xf32>
    %99 = vector.broadcast %98 : vector<1x128xf32> to vector<24x128xf32>
    %100 = arith.mulf %97, %99 : vector<24x128xf32>
    %c1_i32_25 = arith.constant 1 : i32
    %101 = tpu.dynamic_rotate %96 by %c1_i32_25 dim 0 : vector<24x128xf32>, i32 -> vector<24x128xf32>
    %102 = vector.extract_strided_slice %80 {offsets = [5, 0], sizes = [1, 128], strides = [1, 1]} : vector<16x128xf32> to vector<1x128xf32>
    %103 = vector.broadcast %102 : vector<1x128xf32> to vector<24x128xf32>
    %104 = arith.mulf %101, %103 : vector<24x128xf32>
    %105 = arith.addf %100, %104 : vector<24x128xf32>
    %106 = vector.extract_strided_slice %80 {offsets = [6, 0], sizes = [1, 128], strides = [1, 1]} : vector<16x128xf32> to vector<1x128xf32>
    %107 = vector.broadcast %106 : vector<1x128xf32> to vector<24x128xf32>
    %108 = arith.mulf %96, %107 : vector<24x128xf32>
    %109 = arith.addf %105, %108 : vector<24x128xf32>
    %c23_i32_26 = arith.constant 23 : i32
    %110 = tpu.dynamic_rotate %96 by %c23_i32_26 dim 0 : vector<24x128xf32>, i32 -> vector<24x128xf32>
    %111 = vector.extract_strided_slice %80 {offsets = [7, 0], sizes = [1, 128], strides = [1, 1]} : vector<16x128xf32> to vector<1x128xf32>
    %112 = vector.broadcast %111 : vector<1x128xf32> to vector<24x128xf32>
    %113 = arith.mulf %110, %112 : vector<24x128xf32>
    %114 = arith.addf %109, %113 : vector<24x128xf32>
    %c22_i32_27 = arith.constant 22 : i32
    %115 = tpu.dynamic_rotate %96 by %c22_i32_27 dim 0 : vector<24x128xf32>, i32 -> vector<24x128xf32>
    %116 = vector.extract_strided_slice %80 {offsets = [8, 0], sizes = [1, 128], strides = [1, 1]} : vector<16x128xf32> to vector<1x128xf32>
    %117 = vector.broadcast %116 : vector<1x128xf32> to vector<24x128xf32>
    %118 = arith.mulf %115, %117 : vector<24x128xf32>
    %119 = arith.addf %114, %118 : vector<24x128xf32>
    %120 = vector.broadcast %82 : vector<1x128xf32> to vector<24x128xf32>
    %121 = arith.addf %119, %120 : vector<24x128xf32>
    %cst_28 = arith.constant 0.000000e+00 : f32
    %122 = vector.broadcast %cst_28 : f32 to vector<24x128xf32>
    %123 = arith.cmpf oge, %121, %122 : vector<24x128xf32>
    %cst_29 = arith.constant 3.000000e-01 : f32
    %124 = vector.broadcast %cst_29 : f32 to vector<24x128xf32>
    %125 = arith.mulf %124, %121 : vector<24x128xf32>
    %126 = arith.select %123, %121, %125 : vector<24x128xi1>, vector<24x128xf32>
    %127 = vector.broadcast %5 : vector<1x128xf32> to vector<24x128xf32>
    %128 = arith.mulf %126, %127 : vector<24x128xf32>
    %cst_30 = arith.constant dense<0.000000e+00> : vector<24xf32>
    %129 = vector.multi_reduction <add>, %128, %cst_30 [1] : vector<24x128xf32> to vector<24xf32>
    %130 = vector.shape_cast %129 : vector<24xf32> to vector<24x1xf32>
    %cst_31 = arith.constant 3.125000e-02 : f32
    %131 = vector.broadcast %cst_31 : f32 to vector<24x1xf32>
    %132 = arith.mulf %130, %131 : vector<24x1xf32>
    %133 = vector.broadcast %132 : vector<24x1xf32> to vector<24x128xf32>
    %134 = arith.subf %126, %133 : vector<24x128xf32>
    %135 = vector.broadcast %5 : vector<1x128xf32> to vector<24x128xf32>
    %136 = arith.mulf %134, %135 : vector<24x128xf32>
    %137 = arith.mulf %136, %136 : vector<24x128xf32>
    %cst_32 = arith.constant dense<0.000000e+00> : vector<24xf32>
    %138 = vector.multi_reduction <add>, %137, %cst_32 [1] : vector<24x128xf32> to vector<24xf32>
    %139 = vector.shape_cast %138 : vector<24xf32> to vector<24x1xf32>
    %cst_33 = arith.constant 3.125000e-02 : f32
    %140 = vector.broadcast %cst_33 : f32 to vector<24x1xf32>
    %141 = arith.mulf %139, %140 : vector<24x1xf32>
    %cst_34 = arith.constant 9.99999974E-6 : f32
    %142 = vector.broadcast %cst_34 : f32 to vector<24x1xf32>
    %143 = arith.addf %141, %142 : vector<24x1xf32>
    %144 = math.rsqrt %143 : vector<24x1xf32>
    %145 = vector.broadcast %144 : vector<24x1xf32> to vector<24x128xf32>
    %146 = arith.mulf %136, %145 : vector<24x128xf32>
    %147 = vector.broadcast %83 : vector<1x128xf32> to vector<24x128xf32>
    %148 = arith.mulf %146, %147 : vector<24x128xf32>
    %149 = vector.broadcast %84 : vector<1x128xf32> to vector<24x128xf32>
    %150 = arith.addf %148, %149 : vector<24x128xf32>
    %c1_i32_35 = arith.constant 1 : i32
    %151 = arith.muli %arg0, %c1_i32_35 : i32
    %c0_i32 = arith.constant 0 : i32
    %152 = arith.addi %151, %c0_i32 : i32
    %153 = arith.index_cast %152 : i32 to index
    %154 = memref.load %arg1[%153] : memref<2xi32, #tpu.memory_space<smem>>
    %155 = vector.broadcast %154 : i32 to vector<24x1xi32>
    %156 = arith.cmpi slt, %0, %155 : vector<24x1xi32>
    %cst_36 = arith.constant 0.000000e+00 : f32
    %157 = vector.shape_cast %156 : vector<24x1xi1> to vector<24x1xi1>
    %158 = vector.broadcast %157 : vector<24x1xi1> to vector<24x128xi1>
    %159 = vector.broadcast %cst_36 : f32 to vector<24x128xf32>
    %160 = arith.select %158, %150, %159 : vector<24x128xi1>, vector<24x128xf32>
    %161 = arith.truncf %160 : vector<24x128xf32> to vector<24x128xbf16>
    %c0_37 = arith.constant 0 : index
    %c0_38 = arith.constant 0 : index
    %c0_39 = arith.constant 0 : index
    %162 = vector.load %arg5[%c0_37, %c0_38, %c0_39] : memref<1x24x128xbf16, #tpu.memory_space<vmem>>, vector<1x24x128xbf16>
    %163 = vector.shape_cast %162 : vector<1x24x128xbf16> to vector<24x128xbf16>
    %164 = vector.shape_cast %161 : vector<24x128xbf16> to vector<1x24x128xbf16>
    tpu.vector_store %arg5[%c0_37, %c0_38, %c0_39], %164 {strides = array<i32>} : memref<1x24x128xbf16, #tpu.memory_space<vmem>>, vector<1x24x128xbf16>,
    return
  }
  func.func @transform_0(%arg0: i32, %arg1: memref<2xi32, #tpu.memory_space<smem>>) -> (i32, i32, i32) {
    %c0_i32 = arith.constant 0 : i32
    %c0_i32_0 = arith.constant 0 : i32
    %c0_i32_1 = arith.constant 0 : i32
    return %arg0, %c0_i32, %c0_i32_0 : i32, i32, i32
  }
  func.func @transform_1(%arg0: i32, %arg1: memref<2xi32, #tpu.memory_space<smem>>) -> (i32, i32, i32) {
    %c0_i32 = arith.constant 0 : i32
    %c0_i32_0 = arith.constant 0 : i32
    %c0_i32_1 = arith.constant 0 : i32
    %c0_i32_2 = arith.constant 0 : i32
    return %c0_i32, %c0_i32_0, %c0_i32_1 : i32, i32, i32
  }
  func.func @transform_2(%arg0: i32, %arg1: memref<2xi32, #tpu.memory_space<smem>>) -> (i32, i32, i32) {
    %c0_i32 = arith.constant 0 : i32
    %c0_i32_0 = arith.constant 0 : i32
    %c0_i32_1 = arith.constant 0 : i32
    %c0_i32_2 = arith.constant 0 : i32
    return %c0_i32, %c0_i32_0, %c0_i32_1 : i32, i32, i32
  }
  func.func @transform_3(%arg0: i32, %arg1: memref<2xi32, #tpu.memory_space<smem>>) -> (i32, i32, i32) {
    %c0_i32 = arith.constant 0 : i32
    %c0_i32_0 = arith.constant 0 : i32
    %c0_i32_1 = arith.constant 0 : i32
    return %arg0, %c0_i32, %c0_i32_0 : i32, i32, i32
  }
}

module attributes {stable_mosaic.version = 11 : i64} {
  func.func @_prosody_kernel(%arg0: i32, %arg1: memref<2xi32, #tpu.memory_space<smem>>, %arg2: memref<1x24x128xbf16, #tpu.memory_space<vmem>>, %arg3: memref<2x128x128xbf16, #tpu.memory_space<vmem>>, %arg4: memref<2x16x128xf32, #tpu.memory_space<vmem>>, %arg5: memref<1x24x128xbf16, #tpu.memory_space<vmem>>) attributes {dimension_semantics = [#tpu.dimension_semantics<parallel>], iteration_bounds = array<i64: 2>, scalar_prefetch = 1 : i64, scratch_operands = 0 : i64, tpu.core_type = #tpu.core_type<tc>, window_params = [{transform_indices = @transform_0, window_bounds = array<i64: 1, 24, 128>}, {pipeline_mode = #tpu.pipeline_mode<synchronous>, transform_indices = @transform_1, window_bounds = array<i64: 2, 128, 128>}, {pipeline_mode = #tpu.pipeline_mode<synchronous>, transform_indices = @transform_2, window_bounds = array<i64: 2, 16, 128>}, {transform_indices = @transform_3, window_bounds = array<i64: 1, 24, 128>}]} {
    %0 = tpu.iota {dimensions = array<i32: 0>} : vector<24x1xi32>
    %1 = tpu.iota {dimensions = array<i32: 1>} : vector<1x128xi32>
    %c32_i32 = arith.constant 32 : i32
    %2 = vector.broadcast %c32_i32 : i32 to vector<1x128xi32>
    %3 = arith.cmpi slt, %1, %2 : vector<1x128xi32>
    %4 = arith.extui %3 : vector<1x128xi1> to vector<1x128xi32>
    %5 = arith.sitofp %4 : vector<1x128xi32> to vector<1x128xf32>
    %c0 = arith.constant 0 : index
    %c0_0 = arith.constant 0 : index
    %c0_1 = arith.constant 0 : index
    %6 = vector.load %arg2[%c0, %c0_0, %c0_1] : memref<1x24x128xbf16, #tpu.memory_space<vmem>>, vector<1x24x128xbf16>
    %7 = vector.shape_cast %6 : vector<1x24x128xbf16> to vector<24x128xbf16>
    %c0_2 = arith.constant 0 : index
    %c0_3 = arith.constant 0 : index
    %c0_4 = arith.constant 0 : index
    %8 = vector.load %arg4[%c0_2, %c0_3, %c0_4] : memref<2x16x128xf32, #tpu.memory_space<vmem>>, vector<1x16x128xf32>
    %9 = vector.shape_cast %8 : vector<1x16x128xf32> to vector<16x128xf32>
    %10 = vector.extract_strided_slice %9 {offsets = [0, 0], sizes = [1, 128], strides = [1, 1]} : vector<16x128xf32> to vector<1x128xf32>
    %11 = vector.extract_strided_slice %9 {offsets = [1, 0], sizes = [1, 128], strides = [1, 1]} : vector<16x128xf32> to vector<1x128xf32>
    %12 = vector.extract_strided_slice %9 {offsets = [2, 0], sizes = [1, 128], strides = [1, 1]} : vector<16x128xf32> to vector<1x128xf32>
    %13 = vector.extract_strided_slice %9 {offsets = [3, 0], sizes = [1, 128], strides = [1, 1]} : vector<16x128xf32> to vector<1x128xf32>
    %c0_5 = arith.constant 0 : index
    %c0_6 = arith.constant 0 : index
    %c0_7 = arith.constant 0 : index
    %14 = vector.load %arg3[%c0_5, %c0_6, %c0_7] : memref<2x128x128xbf16, #tpu.memory_space<vmem>>, vector<1x128x128xbf16>
    %15 = vector.shape_cast %14 : vector<1x128x128xbf16> to vector<128x128xbf16>
    %cst = arith.constant dense<0.000000e+00> : vector<24x128xf32>
    %16 = tpu.matmul %7, %15, %cst {dimension_numbers = #tpu.dot_dimension_numbers<[1], [0], [0], [1], [0, 0, 1, 1], [], []>} : vector<24x128xbf16>, vector<128x128xbf16>, vector<24x128xf32> -> vector<24x128xf32>
    %17 = vector.broadcast %10 : vector<1x128xf32> to vector<24x128xf32>
    %18 = arith.addf %16, %17 : vector<24x128xf32>
    %c16_i32 = arith.constant 16 : i32
    %19 = vector.broadcast %c16_i32 : i32 to vector<24x1xi32>
    %20 = arith.cmpi slt, %0, %19 : vector<24x1xi32>
    %cst_8 = arith.constant 0.000000e+00 : f32
    %21 = vector.shape_cast %20 : vector<24x1xi1> to vector<24x1xi1>
    %22 = vector.broadcast %21 : vector<24x1xi1> to vector<24x128xi1>
    %23 = vector.broadcast %cst_8 : f32 to vector<24x128xf32>
    %24 = arith.select %22, %18, %23 : vector<24x128xi1>, vector<24x128xf32>
    %c2_i32 = arith.constant 2 : i32
    %25 = tpu.dynamic_rotate %24 by %c2_i32 dim 0 : vector<24x128xf32>, i32 -> vector<24x128xf32>
    %26 = vector.extract_strided_slice %9 {offsets = [4, 0], sizes = [1, 128], strides = [1, 1]} : vector<16x128xf32> to vector<1x128xf32>
    %27 = vector.broadcast %26 : vector<1x128xf32> to vector<24x128xf32>
    %28 = arith.mulf %25, %27 : vector<24x128xf32>
    %c1_i32 = arith.constant 1 : i32
    %29 = tpu.dynamic_rotate %24 by %c1_i32 dim 0 : vector<24x128xf32>, i32 -> vector<24x128xf32>
    %30 = vector.extract_strided_slice %9 {offsets = [5, 0], sizes = [1, 128], strides = [1, 1]} : vector<16x128xf32> to vector<1x128xf32>
    %31 = vector.broadcast %30 : vector<1x128xf32> to vector<24x128xf32>
    %32 = arith.mulf %29, %31 : vector<24x128xf32>
    %33 = arith.addf %28, %32 : vector<24x128xf32>
    %34 = vector.extract_strided_slice %9 {offsets = [6, 0], sizes = [1, 128], strides = [1, 1]} : vector<16x128xf32> to vector<1x128xf32>
    %35 = vector.broadcast %34 : vector<1x128xf32> to vector<24x128xf32>
    %36 = arith.mulf %24, %35 : vector<24x128xf32>
    %37 = arith.addf %33, %36 : vector<24x128xf32>
    %c23_i32 = arith.constant 23 : i32
    %38 = tpu.dynamic_rotate %24 by %c23_i32 dim 0 : vector<24x128xf32>, i32 -> vector<24x128xf32>
    %39 = vector.extract_strided_slice %9 {offsets = [7, 0], sizes = [1, 128], strides = [1, 1]} : vector<16x128xf32> to vector<1x128xf32>
    %40 = vector.broadcast %39 : vector<1x128xf32> to vector<24x128xf32>
    %41 = arith.mulf %38, %40 : vector<24x128xf32>
    %42 = arith.addf %37, %41 : vector<24x128xf32>
    %c22_i32 = arith.constant 22 : i32
    %43 = tpu.dynamic_rotate %24 by %c22_i32 dim 0 : vector<24x128xf32>, i32 -> vector<24x128xf32>
    %44 = vector.extract_strided_slice %9 {offsets = [8, 0], sizes = [1, 128], strides = [1, 1]} : vector<16x128xf32> to vector<1x128xf32>
    %45 = vector.broadcast %44 : vector<1x128xf32> to vector<24x128xf32>
    %46 = arith.mulf %43, %45 : vector<24x128xf32>
    %47 = arith.addf %42, %46 : vector<24x128xf32>
    %48 = vector.broadcast %11 : vector<1x128xf32> to vector<24x128xf32>
    %49 = arith.addf %47, %48 : vector<24x128xf32>
    %cst_9 = arith.constant 0.000000e+00 : f32
    %50 = vector.broadcast %cst_9 : f32 to vector<24x128xf32>
    %51 = arith.cmpf oge, %49, %50 : vector<24x128xf32>
    %cst_10 = arith.constant 3.000000e-01 : f32
    %52 = vector.broadcast %cst_10 : f32 to vector<24x128xf32>
    %53 = arith.mulf %52, %49 : vector<24x128xf32>
    %54 = arith.select %51, %49, %53 : vector<24x128xi1>, vector<24x128xf32>
    %55 = vector.broadcast %5 : vector<1x128xf32> to vector<24x128xf32>
    %56 = arith.mulf %54, %55 : vector<24x128xf32>
    %cst_11 = arith.constant dense<0.000000e+00> : vector<24xf32>
    %57 = vector.multi_reduction <add>, %56, %cst_11 [1] : vector<24x128xf32> to vector<24xf32>
    %58 = vector.shape_cast %57 : vector<24xf32> to vector<24x1xf32>
    %cst_12 = arith.constant 3.125000e-02 : f32
    %59 = vector.broadcast %cst_12 : f32 to vector<24x1xf32>
    %60 = arith.mulf %58, %59 : vector<24x1xf32>
    %61 = vector.broadcast %60 : vector<24x1xf32> to vector<24x128xf32>
    %62 = arith.subf %54, %61 : vector<24x128xf32>
    %63 = vector.broadcast %5 : vector<1x128xf32> to vector<24x128xf32>
    %64 = arith.mulf %62, %63 : vector<24x128xf32>
    %65 = arith.mulf %64, %64 : vector<24x128xf32>
    %cst_13 = arith.constant dense<0.000000e+00> : vector<24xf32>
    %66 = vector.multi_reduction <add>, %65, %cst_13 [1] : vector<24x128xf32> to vector<24xf32>
    %67 = vector.shape_cast %66 : vector<24xf32> to vector<24x1xf32>
    %cst_14 = arith.constant 3.125000e-02 : f32
    %68 = vector.broadcast %cst_14 : f32 to vector<24x1xf32>
    %69 = arith.mulf %67, %68 : vector<24x1xf32>
    %cst_15 = arith.constant 9.99999974E-6 : f32
    %70 = vector.broadcast %cst_15 : f32 to vector<24x1xf32>
    %71 = arith.addf %69, %70 : vector<24x1xf32>
    %72 = math.rsqrt %71 : vector<24x1xf32>
    %73 = vector.broadcast %72 : vector<24x1xf32> to vector<24x128xf32>
    %74 = arith.mulf %64, %73 : vector<24x128xf32>
    %75 = vector.broadcast %12 : vector<1x128xf32> to vector<24x128xf32>
    %76 = arith.mulf %74, %75 : vector<24x128xf32>
    %77 = vector.broadcast %13 : vector<1x128xf32> to vector<24x128xf32>
    %78 = arith.addf %76, %77 : vector<24x128xf32>
    %c1 = arith.constant 1 : index
    %c0_16 = arith.constant 0 : index
    %c0_17 = arith.constant 0 : index
    %79 = vector.load %arg4[%c1, %c0_16, %c0_17] : memref<2x16x128xf32, #tpu.memory_space<vmem>>, vector<1x16x128xf32>
    %80 = vector.shape_cast %79 : vector<1x16x128xf32> to vector<16x128xf32>
    %81 = vector.extract_strided_slice %80 {offsets = [0, 0], sizes = [1, 128], strides = [1, 1]} : vector<16x128xf32> to vector<1x128xf32>
    %82 = vector.extract_strided_slice %80 {offsets = [1, 0], sizes = [1, 128], strides = [1, 1]} : vector<16x128xf32> to vector<1x128xf32>
    %83 = vector.extract_strided_slice %80 {offsets = [2, 0], sizes = [1, 128], strides = [1, 1]} : vector<16x128xf32> to vector<1x128xf32>
    %84 = vector.extract_strided_slice %80 {offsets = [3, 0], sizes = [1, 128], strides = [1, 1]} : vector<16x128xf32> to vector<1x128xf32>
    %85 = arith.truncf %78 : vector<24x128xf32> to vector<24x128xbf16>
    %c1_18 = arith.constant 1 : index
    %c0_19 = arith.constant 0 : index
    %c0_20 = arith.constant 0 : index
    %86 = vector.load %arg3[%c1_18, %c0_19, %c0_20] : memref<2x128x128xbf16, #tpu.memory_space<vmem>>, vector<1x128x128xbf16>
    %87 = vector.shape_cast %86 : vector<1x128x128xbf16> to vector<128x128xbf16>
    %cst_21 = arith.constant dense<0.000000e+00> : vector<24x128xf32>
    %88 = tpu.matmul %85, %87, %cst_21 {dimension_numbers = #tpu.dot_dimension_numbers<[1], [0], [0], [1], [0, 0, 1, 1], [], []>} : vector<24x128xbf16>, vector<128x128xbf16>, vector<24x128xf32> -> vector<24x128xf32>
    %89 = vector.broadcast %81 : vector<1x128xf32> to vector<24x128xf32>
    %90 = arith.addf %88, %89 : vector<24x128xf32>
    %c16_i32_22 = arith.constant 16 : i32
    %91 = vector.broadcast %c16_i32_22 : i32 to vector<24x1xi32>
    %92 = arith.cmpi slt, %0, %91 : vector<24x1xi32>
    %cst_23 = arith.constant 0.000000e+00 : f32
    %93 = vector.shape_cast %92 : vector<24x1xi1> to vector<24x1xi1>
    %94 = vector.broadcast %93 : vector<24x1xi1> to vector<24x128xi1>
    %95 = vector.broadcast %cst_23 : f32 to vector<24x128xf32>
    %96 = arith.select %94, %90, %95 : vector<24x128xi1>, vector<24x128xf32>
    %c2_i32_24 = arith.constant 2 : i32
    %97 = tpu.dynamic_rotate %96 by %c2_i32_24 dim 0 : vector<24x128xf32>, i32 -> vector<24x128xf32>
    %98 = vector.extract_strided_slice %80 {offsets = [4, 0], sizes = [1, 128], strides = [1, 1]} : vector<16x128xf32> to vector<1x128xf32>
    %99 = vector.broadcast %98 : vector<1x128xf32> to vector<24x128xf32>
    %100 = arith.mulf %97, %99 : vector<24x128xf32>
    %c1_i32_25 = arith.constant 1 : i32
    %101 = tpu.dynamic_rotate %96 by %c1_i32_25 dim 0 : vector<24x128xf32>, i32 -> vector<24x128xf32>
    %102 = vector.extract_strided_slice %80 {offsets = [5, 0], sizes = [1, 128], strides = [1, 1]} : vector<16x128xf32> to vector<1x128xf32>
    %103 = vector.broadcast %102 : vector<1x128xf32> to vector<24x128xf32>
    %104 = arith.mulf %101, %103 : vector<24x128xf32>
    %105 = arith.addf %100, %104 : vector<24x128xf32>
    %106 = vector.extract_strided_slice %80 {offsets = [6, 0], sizes = [1, 128], strides = [1, 1]} : vector<16x128xf32> to vector<1x128xf32>
    %107 = vector.broadcast %106 : vector<1x128xf32> to vector<24x128xf32>
    %108 = arith.mulf %96, %107 : vector<24x128xf32>
    %109 = arith.addf %105, %108 : vector<24x128xf32>
    %c23_i32_26 = arith.constant 23 : i32
    %110 = tpu.dynamic_rotate %96 by %c23_i32_26 dim 0 : vector<24x128xf32>, i32 -> vector<24x128xf32>
    %111 = vector.extract_strided_slice %80 {offsets = [7, 0], sizes = [1, 128], strides = [1, 1]} : vector<16x128xf32> to vector<1x128xf32>
    %112 = vector.broadcast %111 : vector<1x128xf32> to vector<24x128xf32>
    %113 = arith.mulf %110, %112 : vector<24x128xf32>
    %114 = arith.addf %109, %113 : vector<24x128xf32>
    %c22_i32_27 = arith.constant 22 : i32
    %115 = tpu.dynamic_rotate %96 by %c22_i32_27 dim 0 : vector<24x128xf32>, i32 -> vector<24x128xf32>
    %116 = vector.extract_strided_slice %80 {offsets = [8, 0], sizes = [1, 128], strides = [1, 1]} : vector<16x128xf32> to vector<1x128xf32>
    %117 = vector.broadcast %116 : vector<1x128xf32> to vector<24x128xf32>
    %118 = arith.mulf %115, %117 : vector<24x128xf32>
    %119 = arith.addf %114, %118 : vector<24x128xf32>
    %120 = vector.broadcast %82 : vector<1x128xf32> to vector<24x128xf32>
    %121 = arith.addf %119, %120 : vector<24x128xf32>
    %cst_28 = arith.constant 0.000000e+00 : f32
    %122 = vector.broadcast %cst_28 : f32 to vector<24x128xf32>
    %123 = arith.cmpf oge, %121, %122 : vector<24x128xf32>
    %cst_29 = arith.constant 3.000000e-01 : f32
    %124 = vector.broadcast %cst_29 : f32 to vector<24x128xf32>
    %125 = arith.mulf %124, %121 : vector<24x128xf32>
    %126 = arith.select %123, %121, %125 : vector<24x128xi1>, vector<24x128xf32>
    %127 = vector.broadcast %5 : vector<1x128xf32> to vector<24x128xf32>
    %128 = arith.mulf %126, %127 : vector<24x128xf32>
    %cst_30 = arith.constant dense<0.000000e+00> : vector<24xf32>
    %129 = vector.multi_reduction <add>, %128, %cst_30 [1] : vector<24x128xf32> to vector<24xf32>
    %130 = vector.shape_cast %129 : vector<24xf32> to vector<24x1xf32>
    %cst_31 = arith.constant 3.125000e-02 : f32
    %131 = vector.broadcast %cst_31 : f32 to vector<24x1xf32>
    %132 = arith.mulf %130, %131 : vector<24x1xf32>
    %133 = vector.broadcast %132 : vector<24x1xf32> to vector<24x128xf32>
    %134 = arith.subf %126, %133 : vector<24x128xf32>
    %135 = vector.broadcast %5 : vector<1x128xf32> to vector<24x128xf32>
    %136 = arith.mulf %134, %135 : vector<24x128xf32>
    %137 = arith.mulf %136, %136 : vector<24x128xf32>
    %cst_32 = arith.constant dense<0.000000e+00> : vector<24xf32>
    %138 = vector.multi_reduction <add>, %137, %cst_32 [1] : vector<24x128xf32> to vector<24xf32>
    %139 = vector.shape_cast %138 : vector<24xf32> to vector<24x1xf32>
    %cst_33 = arith.constant 3.125000e-02 : f32
    %140 = vector.broadcast %cst_33 : f32 to vector<24x1xf32>
    %141 = arith.mulf %139, %140 : vector<24x1xf32>
    %cst_34 = arith.constant 9.99999974E-6 : f32
    %142 = vector.broadcast %cst_34 : f32 to vector<24x1xf32>
    %143 = arith.addf %141, %142 : vector<24x1xf32>
    %144 = math.rsqrt %143 : vector<24x1xf32>
    %145 = vector.broadcast %144 : vector<24x1xf32> to vector<24x128xf32>
    %146 = arith.mulf %136, %145 : vector<24x128xf32>
    %147 = vector.broadcast %83 : vector<1x128xf32> to vector<24x128xf32>
    %148 = arith.mulf %146, %147 : vector<24x128xf32>
    %149 = vector.broadcast %84 : vector<1x128xf32> to vector<24x128xf32>
    %150 = arith.addf %148, %149 : vector<24x128xf32>
    %c1_i32_35 = arith.constant 1 : i32
    %151 = arith.muli %arg0, %c1_i32_35 : i32
    %c0_i32 = arith.constant 0 : i32
    %152 = arith.addi %151, %c0_i32 : i32
    %153 = arith.index_cast %152 : i32 to index
    %154 = memref.load %arg1[%153] : memref<2xi32, #tpu.memory_space<smem>>
    %155 = vector.broadcast %154 : i32 to vector<24x1xi32>
    %156 = arith.cmpi slt, %0, %155 : vector<24x1xi32>
    %cst_36 = arith.constant 0.000000e+00 : f32
    %157 = vector.shape_cast %156 : vector<24x1xi1> to vector<24x1xi1>
    %158 = vector.broadcast %157 : vector<24x1xi1> to vector<24x128xi1>
    %159 = vector.broadcast %cst_36 : f32 to vector<24x128xf32>
    %160 = arith.select %158, %150, %159 : vector<24x128xi1>, vector<24x128xf32>
    %161 = arith.truncf %160 : vector<24x128xf32> to vector<24x128xbf16>
    %c0_37 = arith.constant 0 : index
    %c0_38 = arith.constant 0 : index
    %c0_39 = arith.constant 0 : index
    %162 = vector.load %arg5[%c0_37, %c0_38, %c0_39] : memref<1x24x128xbf16, #tpu.memory_space<vmem>>, vector<1x24x128xbf16>
    %163 = vector.shape_cast %162 : vector<1x24x128xbf16> to vector<24x128xbf16>
    %164 = vector.shape_cast %161 : vector<24x128xbf16> to vector<1x24x128xbf16>
    tpu.vector_store %arg5[%c0_37, %c0_38, %c0_39], %164 {strides = array<i32>} : memref<1x24x128xbf16, #tpu.memory_space<vmem>>, vector<1x24x128xbf16>,
    return
  }
  func.func @transform_0(%arg0: i32, %arg1: memref<2xi32, #tpu.memory_space<smem>>) -> (i32, i32, i32) {
    %c0_i32 = arith.constant 0 : i32
    %c0_i32_0 = arith.constant 0 : i32
    %c0_i32_1 = arith.constant 0 : i32
    return %arg0, %c0_i32, %c0_i32_0 : i32, i32, i32
  }
  func.func @transform_1(%arg0: i32, %arg1: memref<2xi32, #tpu.memory_space<smem>>) -> (i32, i32, i32) {
    %c0_i32 = arith.constant 0 : i32
    %c0_i32_0 = arith.constant 0 : i32
    %c0_i32_1 = arith.constant 0 : i32
    %c0_i32_2 = arith.constant 0 : i32
    return %c0_i32, %c0_i32_0, %c0_i32_1 : i32, i32, i32
  }
  func.func @transform_2(%arg0: i32, %arg1: memref<2xi32, #tpu.memory_space<smem>>) -> (i32, i32, i32) {
    %c0_i32 = arith.constant 0 : i32
    %c0_i32_0 = arith.constant 0 : i32
    %c0_i32_1 = arith.constant 0 : i32
    %c0_i32_2 = arith.constant 0 : i32
    return %c0_i32, %c0_i32_0, %c0_i32_1 : i32, i32, i32
  }
  func.func @transform_3(%arg0: i32, %arg1: memref<2xi32, #tpu.memory_space<smem>>) -> (i32, i32, i32) {
    %c0_i32 = arith.constant 0 : i32
    %c0_i32_0 = arith.constant 0 : i32
    %c0_i32_1 = arith.constant 0 : i32
    return %arg0, %c0_i32, %c0_i32_0 : i32, i32, i32
  }
}

</mosaic_0001>

<llo_original>
// kernel: tpu_custom_call.1
$region0: #{tpu_custom_call.1}
  #allocation0 [shape = 'u32[]', space=smem, size = 0x4, offset = 0x4, fixed_abs, tag = 'smem constant byte address 0x4 - core index']
  #allocation1 [shape = 'u32[144,128]{1,0:T(1,128)}', space=vmem, size = 0x12000, scoped, tag = 'internal scratch']
  #allocation2 [shape = 's32[1]{0}', space=sflag, size = 0x4, scoped, tag = 'scoped memory for tpu_custom_call.1']
  #allocation3 [shape = 'u8[512]{0}', space=smem, size = 0x200, scoped, tag = 'prefetched SMEM operand 0']
  %s0 = inlined_call_operand.hbm [shape: s32[2], index: 0, kind: input, shape index: {}]
  %s1 = inlined_call_operand.hbm [shape: bf16[2,24,128], index: 1, kind: input, shape index: {}]
  %s2 = inlined_call_operand.hbm [shape: bf16[2,128,128], index: 2, kind: input, shape index: {}]
  %s3 = inlined_call_operand.hbm [shape: f32[2,16,128], index: 3, kind: input, shape index: {}]
  %s4 = inlined_call_operand.hbm [shape: bf16[2,24,128], index: 4, kind: output, shape index: {}]
  %s5 = sld [smem:[#allocation0]]
  $region57: #{tpu_custom_call.1} parent=0
    _
  %s7 = ssub.s32 1, %s5
  %s8 = scalar_select 0, %s7, %s5
  %10 = dma.hbm_to_smem %s0, 16, [#allocation3], [#allocation2]
  %11 = dma.done [#allocation2], 16
  %12 = sfence
  $region1: #{tpu_custom_call.1} parent=0
    #allocation4 [shape = 'u8[12288]{0}', space=vmem, size = 0x3000, scoped, tag = 'input window, operand 1']
    #allocation5 [shape = 's32[2]{0}', space=sflag, size = 0x8, scoped, tag = 'scoped memory for tpu_custom_call.1']
    #allocation6 [shape = 's32[2]{0}', space=sflag, size = 0x8, scoped, tag = 'scoped memory for tpu_custom_call.1']
    #allocation7 [shape = 'u8[65536]{0}', space=vmem, size = 0x10000, scoped, tag = 'input window, operand 2, single buffered']
    #allocation8 [shape = 's32[1]{0}', space=sflag, size = 0x4, scoped, tag = 'scoped memory for tpu_custom_call.1']
    #allocation9 [shape = 'u8[16384]{0}', space=vmem, size = 0x4000, scoped, tag = 'input window, operand 3, single buffered']
    #allocation10 [shape = 'u8[12288]{0}', space=vmem, size = 0x3000, scoped, tag = 'output window, operand 0']
    %13 = vsyncpa [#allocation5], 0
    %s14 = scalar_lea.sflag [#allocation5], 1
    %15 = vsyncpa %s14, 0
    %16 = vsyncpa [#allocation8], 0
    %17 = vsyncpa [#allocation6], 0
    %s18 = scalar_lea.sflag [#allocation6], 1
    %19 = vsyncpa %s18, 0
    loop: start=0, step=1, limit=4
    $region2: #{tpu_custom_call.1} parent=1 // loop_pre_header
      _
    $region3: #{tpu_custom_call.1} parent=1 // loop_header
      %s21 = sphi 0, %s25
      %p22 = scmp.ge.s32.totalorder %s21, 4
      %s31 = sphi 0, %s33
      %s34 = sphi 0, %s31
      %s35 = sphi 0, %s34
      %s51 = sphi 0, %s35
      %s55 = sphi 0, %s55
      %s57 = sphi 0, %s55
      %s58 = sphi 0, %s57
      %s72 = sphi 0, %s58
      %s76 = sphi 0, %s76
      %s78 = sphi 0, %s76
      %s79 = sphi 0, %s78
      %s93 = sphi 0, %s79
      %s99 = sphi 0, %s101
      %s102 = sphi 0, %s99
      %s103 = sphi 0, %s102
      %s119 = sphi 0, %s103
    $region4: #{tpu_custom_call.1} parent=1 // loop_header_branch
      %24 = sbr.rel (%p22) target = $region8
    $region5: #{tpu_custom_call.1} parent=1 // loop_body
      %s26 = ssub.s32 %s21, 1
      %s27 = ssub.s32 %s21, 2
      %s28 = sadd.s32 %s21, 1
      %s29 = ssub.s32 %s21, %s28
      %p30 = scmp.eq.s32.totalorder %s29, 0
      %s32 = sadd.s32 %s31, 1
      %s33 = scalar_select %p30, %s31, %s32
      %p36 = pneg %p30
      %p37 = scmp.eq.s32.totalorder %s21, 1
      %p38 = por %p36, %p37
      %p39 = scmp.ne.s32.totalorder %s31, %s34
      %p40 = scmp.eq.s32.totalorder %s21, 0
      %p41 = por %p39, %p40
      %p42 = scmp.ne.s32.totalorder %s31, %s34
      %p43 = scmp.eq.s32.totalorder %s26, 1
      %p44 = por %p42, %p43
      %p45 = scmp.ne.s32.totalorder %s34, %s35
      %p46 = scmp.eq.s32.totalorder %s26, 0
      %p47 = por %p45, %p46
      %p48 = scmp.ne.s32.totalorder %s34, %s35
      %p49 = scmp.eq.s32.totalorder %s27, 1
      %p50 = por %p48, %p49
      %p52 = scmp.ne.s32.totalorder %s35, %s51
      %p53 = scmp.eq.s32.totalorder %s27, 0
      %p54 = por %p52, %p53
      %s56 = sadd.s32 %s55, 1
      %p59 = scmp.eq.s32.totalorder %s21, 1
      %p60 = scmp.ne.s32.totalorder %s55, %s57
      %p61 = scmp.eq.s32.totalorder %s21, 0
      %p62 = por %p60, %p61
      %p63 = scmp.ne.s32.totalorder %s55, %s57
      %p64 = scmp.eq.s32.totalorder %s26, 1
      %p65 = por %p63, %p64
      %p66 = scmp.ne.s32.totalorder %s57, %s58
      %p67 = scmp.eq.s32.totalorder %s26, 0
      %p68 = por %p66, %p67
      %p69 = scmp.ne.s32.totalorder %s57, %s58
      %p70 = scmp.eq.s32.totalorder %s27, 1
      %p71 = por %p69, %p70
      %p73 = scmp.ne.s32.totalorder %s58, %s72
      %p74 = scmp.eq.s32.totalorder %s27, 0
      %p75 = por %p73, %p74
      %s77 = sadd.s32 %s76, 1
      %p80 = scmp.eq.s32.totalorder %s21, 1
      %p81 = scmp.ne.s32.totalorder %s76, %s78
      %p82 = scmp.eq.s32.totalorder %s21, 0
      %p83 = por %p81, %p82
      %p84 = scmp.ne.s32.totalorder %s76, %s78
      %p85 = scmp.eq.s32.totalorder %s26, 1
      %p86 = por %p84, %p85
      %p87 = scmp.ne.s32.totalorder %s78, %s79
      %p88 = scmp.eq.s32.totalorder %s26, 0
      %p89 = por %p87, %p88
      %p90 = scmp.ne.s32.totalorder %s78, %s79
      %p91 = scmp.eq.s32.totalorder %s27, 1
      %p92 = por %p90, %p91
      %p94 = scmp.ne.s32.totalorder %s79, %s93
      %p95 = scmp.eq.s32.totalorder %s27, 0
      %p96 = por %p94, %p95
      %s97 = ssub.s32 %s21, %s28
      %p98 = scmp.eq.s32.totalorder %s97, 0
      %s100 = sadd.s32 %s99, 1
      %s101 = scalar_select %p98, %s99, %s100
      %p104 = pneg %p98
      %p105 = scmp.eq.s32.totalorder %s21, 1
      %p106 = por %p104, %p105
      %p107 = scmp.ne.s32.totalorder %s99, %s102
      %p108 = scmp.eq.s32.totalorder %s21, 0
      %p109 = por %p107, %p108
      %p110 = scmp.ne.s32.totalorder %s99, %s102
      %p111 = scmp.eq.s32.totalorder %s26, 1
      %p112 = por %p110, %p111
      %p113 = scmp.ne.s32.totalorder %s102, %s103
      %p114 = scmp.eq.s32.totalorder %s26, 0
      %p115 = por %p113, %p114
      %p116 = scmp.ne.s32.totalorder %s102, %s103
      %p117 = scmp.eq.s32.totalorder %s27, 1
      %p118 = por %p116, %p117
      %p120 = scmp.ne.s32.totalorder %s103, %s119
      %p121 = scmp.eq.s32.totalorder %s27, 0
      %p122 = por %p120, %p121
      %p123 = scmp.le.s32.totalorder 1, %s21
      %p124 = scmp.lt.s32.totalorder %s21, 3
      %p125 = pnand %p123, %p124
      %p126 = pneg %p125
      // Predicated region
      $region9: #{tpu_custom_call.1} parent=5 // pred_check
        _
      $region10: #{tpu_custom_call.1} parent=5 // pred_check_branch
        %128 = sbr.rel (%p125) target = $region12
      $region11: #{tpu_custom_call.1} parent=5 // pred_region
        %s129 = ssub.s32 %s21, 1
        // Predicated region
        $region13: #{tpu_custom_call.1} parent=11 // pred_check
          %p130 = pneg %p68
        $region14: #{tpu_custom_call.1} parent=11 // pred_check_branch
          %132 = sbr.rel (%p130) target = $region16
        $region15: #{tpu_custom_call.1} parent=11 // pred_region
          %s134 = ssub.s32 2048, 2048
          %135 = vsyncadd [#allocation8], %s134
          %s136 = sshll.u32 [#allocation7], 4
          %s137 = int_to_ptr.vmem [resolvable:$true] %s136
          %142 = dma.hbm_to_vmem [thread:$0]  %s2, 2048, %s137, [#allocation8], 64, 64, 4
        $region16: #{tpu_custom_call.1} parent=11 // pred_fallthru
          _
        // Predicated region
        $region17: #{tpu_custom_call.1} parent=11 // pred_check
          %p143 = pneg %p89
        $region18: #{tpu_custom_call.1} parent=11 // pred_check_branch
          %145 = sbr.rel (%p143) target = $region20
        $region19: #{tpu_custom_call.1} parent=11 // pred_region
          %s147 = ssub.s32 512, 512
          %148 = vsyncadd [#allocation8], %s147
          %s149 = sshll.u32 [#allocation9], 4
          %s150 = int_to_ptr.vmem [resolvable:$true] %s149
          %155 = dma.hbm_to_vmem [thread:$0]  %s3, 512, %s150, [#allocation8], 128, 128, 8
        $region20: #{tpu_custom_call.1} parent=11 // pred_fallthru
          _
      $region12: #{tpu_custom_call.1} parent=5 // pred_fallthru
        _
      %p156 = scmp.lt.s32.totalorder %s21, 2
      // Predicated region
      $region21: #{tpu_custom_call.1} parent=5 // pred_check
        %p157 = pneg %p156
      $region22: #{tpu_custom_call.1} parent=5 // pred_check_branch
        %159 = sbr.rel (%p157) target = $region24
      $region23: #{tpu_custom_call.1} parent=5 // pred_region
        // Predicated region
        $region25: #{tpu_custom_call.1} parent=23 // pred_check
          %p160 = pneg %p41
        $region26: #{tpu_custom_call.1} parent=23 // pred_check_branch
          %162 = sbr.rel (%p160) target = $region28
        $region27: #{tpu_custom_call.1} parent=23 // pred_region
          %s163 = sand.u32 %s31, 1
          %s164 = scalar_lea.sflag [#allocation5], %s163
          %s165 = sand.u32 %s31, 1
          %s166 = smul.addr %s165, 12
          %s167 = scalar_lea.vmem [#allocation4], %s166
          %s169 = ssub.s32 192, 192
          %170 = vsyncadd %s164, %s169
          %s171 = smul.addr %s21, 3
          %s172 = smul.addr %s171, 64
          %s173 = scalar_lea.hbm %s1, %s172
          %s174 = sshll.u32 %s167, 4
          %s175 = int_to_ptr.vmem [resolvable:$true] %s174
          %180 = dma.hbm_to_vmem [thread:$0]  %s173, 192, %s175, %s164, 64, 64, 4
        $region28: #{tpu_custom_call.1} parent=23 // pred_fallthru
          _
      $region24: #{tpu_custom_call.1} parent=5 // pred_fallthru
        _
      %p181 = scmp.le.s32.totalorder 1, %s21
      %p182 = scmp.lt.s32.totalorder %s21, 3
      %p183 = pnand %p181, %p182
      %p184 = pneg %p183
      // Predicated region
      $region29: #{tpu_custom_call.1} parent=5 // pred_check
        _
      $region30: #{tpu_custom_call.1} parent=5 // pred_check_branch
        %186 = sbr.rel (%p183) target = $region32
      $region31: #{tpu_custom_call.1} parent=5 // pred_region
        %s187 = ssub.s32 %s21, 1
        %s188 = sand.u32 %s34, 1
        %s189 = scalar_lea.sflag [#allocation5], %s188
        %s190 = sand.u32 %s34, 1
        %s191 = smul.addr %s190, 12
        %s192 = scalar_lea.vmem [#allocation4], %s191
        // Predicated region
        $region33: #{tpu_custom_call.1} parent=31 // pred_check
          %p193 = pneg %p47
        $region34: #{tpu_custom_call.1} parent=31 // pred_check_branch
          %195 = sbr.rel (%p193) target = $region36
        $region35: #{tpu_custom_call.1} parent=31 // pred_region
          %196 = dma.done %s189, 192
        $region36: #{tpu_custom_call.1} parent=31 // pred_fallthru
          _
        // Predicated region
        $region37: #{tpu_custom_call.1} parent=31 // pred_check
          %p197 = pneg %p68
        $region38: #{tpu_custom_call.1} parent=31 // pred_check_branch
          %199 = sbr.rel (%p197) target = $region40
        $region39: #{tpu_custom_call.1} parent=31 // pred_region
          %200 = dma.done [#allocation8], 2048
        $region40: #{tpu_custom_call.1} parent=31 // pred_fallthru
          _
        // Predicated region
        $region41: #{tpu_custom_call.1} parent=31 // pred_check
          %p201 = pneg %p89
        $region42: #{tpu_custom_call.1} parent=31 // pred_check_branch
          %203 = sbr.rel (%p201) target = $region44
        $region43: #{tpu_custom_call.1} parent=31 // pred_region
          %204 = dma.done [#allocation8], 512
        $region44: #{tpu_custom_call.1} parent=31 // pred_fallthru
          _
        %s205 = sand.u32 %s34, 1
        %s206 = scalar_lea.sflag [#allocation5], %s205
        %s207 = sand.u32 %s34, 1
        %s208 = smul.addr %s207, 12
        %s209 = scalar_lea.vmem [#allocation4], %s208
        %p210 = pneg %p47
        %p211 = pneg %p44
        %p212 = pneg %p68
        %p213 = pneg %p65
        %p214 = pneg %p89
        %p215 = pneg %p86
        %p216 = pneg %p115
        %p217 = pneg %p112
        %s218 = sand.u32 %s102, 1
        %s219 = scalar_lea.sflag [#allocation6], %s218
        %s220 = sand.u32 %s102, 1
        %s221 = smul.addr %s220, 12
        %s222 = scalar_lea.vmem [#allocation10], %s221
        %v224 = vlaneseq
        %v225 = vshrl.u32 %v224, 7
        %v226 = vadd.s32 %v225, 8
        %v227 = vadd.s32 %v225, 16
        %v228 = vlaneseq
        %v229 = vand.u32 %v228, 127
        %vm230 = vcmp.lt.s32.totalorder %v229, 32
        %v231 = vsel %vm230, 1, 0
        %v232 = vcvt.s32.f32 %v231
        %v233 = vld [vmem:[%s192] sm:$0xf]
        %v234 = vld [vmem:[%s192 + $0x4] sm:$0xf]
        %v235 = vld [vmem:[%s192 + $0x8] sm:$0xf]
        %v236 = vld [vmem:[#allocation9] sm:$0xff]
        %v237 = vld [vmem:[#allocation9 + $0x8] sm:$0xff]
        %v238 = vld [vmem:[#allocation7] sm:$0xf]
        %v239 = vld [vmem:[#allocation7 + $0x4] sm:$0xf]
        %v240 = vld [vmem:[#allocation7 + $0x8] sm:$0xf]
        %v241 = vld [vmem:[#allocation7 + $0xc] sm:$0xf]
        %v242 = vld [vmem:[#allocation7 + $0x10] sm:$0xf]
        %v243 = vld [vmem:[#allocation7 + $0x14] sm:$0xf]
        %v244 = vld [vmem:[#allocation7 + $0x18] sm:$0xf]
        %v245 = vld [vmem:[#allocation7 + $0x1c] sm:$0xf]
        %v246 = vld [vmem:[#allocation7 + $0x20] sm:$0xf]
        %v247 = vld [vmem:[#allocation7 + $0x24] sm:$0xf]
        %v248 = vld [vmem:[#allocation7 + $0x28] sm:$0xf]
        %v249 = vld [vmem:[#allocation7 + $0x2c] sm:$0xf]
        %v250 = vld [vmem:[#allocation7 + $0x30] sm:$0xf]
        %v251 = vld [vmem:[#allocation7 + $0x34] sm:$0xf]
        %v252 = vld [vmem:[#allocation7 + $0x38] sm:$0xf]
        %v253 = vld [vmem:[#allocation7 + $0x3c] sm:$0xf]
        %v254 = vlaneseq
        %v255 = vshrl.u32 %v254, 7
        %v256 = vsub.s32 0, %v255
        %v257 = vrot.slane %v236, %v256
        %v261 = vunpack.c.l.b16 %v233
        %v262 = vunpack.c.l.b16 %v234
        %v263 = vunpack.c.l.b16 %v235
        %v264 = vpack.c.b16 %v262, %v261
        %v265 = vpack.c.b16 %v263, %v263
        %v284 = vunpack.c.l.b16 %v238
        %v285 = vunpack.c.l.b16 %v239
        %v286 = vunpack.c.l.b16 %v240
        %v287 = vunpack.c.l.b16 %v241
        %v288 = vunpack.c.l.b16 %v242
        %v289 = vunpack.c.l.b16 %v243
        %v290 = vunpack.c.l.b16 %v244
        %v291 = vunpack.c.l.b16 %v245
        %v292 = vunpack.c.l.b16 %v246
        %v293 = vunpack.c.l.b16 %v247
        %v294 = vunpack.c.l.b16 %v248
        %v295 = vunpack.c.l.b16 %v249
        %v296 = vunpack.c.l.b16 %v250
        %v297 = vunpack.c.l.b16 %v251
        %v298 = vunpack.c.l.b16 %v252
        %v299 = vunpack.c.l.b16 %v253
        %v300 = vpack.c.b16 %v285, %v284
        %v301 = vpack.c.b16 %v287, %v286
        %v302 = vpack.c.b16 %v289, %v288
        %v303 = vpack.c.b16 %v291, %v290
        %v304 = vpack.c.b16 %v293, %v292
        %v305 = vpack.c.b16 %v295, %v294
        %v306 = vpack.c.b16 %v297, %v296
        %v307 = vpack.c.b16 %v299, %v298
        %316 = vmatprep.subr.bf16.mxu0 0
        %317 = vmatpush1.bf16.msra.mxu0 %v300
        %318 = vmatprep.subr.bf16.mxu0 0
        %319 = vmatpush1.bf16.msra.mxu0 %v301
        %320 = vmatprep.subr.bf16.mxu0 0
        %321 = vmatpush1.bf16.msra.mxu0 %v302
        %322 = vmatprep.subr.bf16.mxu0 0
        %323 = vmatpush1.bf16.msra.mxu0 %v303
        %324 = vmatprep.subr.bf16.mxu0 0
        %325 = vmatpush1.bf16.msra.mxu0 %v304
        %326 = vmatprep.subr.bf16.mxu0 0
        %327 = vmatpush1.bf16.msra.mxu0 %v305
        %328 = vmatprep.subr.bf16.mxu0 0
        %329 = vmatpush1.bf16.msra.mxu0 %v306
        %330 = vmatprep.subr.bf16.mxu0 0
        %331 = vmatpush1.bf16.msra.mxu0 %v307
        %332 = vmatprep.subr.bf16.mxu0 0
        %333 = vmatpush1.bf16.msra.mxu0 0
        %334 = vmatprep.subr.bf16.mxu0 0
        %335 = vmatpush1.bf16.msra.mxu0 0
        %336 = vmatprep.subr.bf16.mxu0 0
        %337 = vmatpush1.bf16.msra.mxu0 0
        %338 = vmatprep.subr.bf16.mxu0 0
        %339 = vmatpush1.bf16.msra.mxu0 0
        %340 = vmatprep.subr.bf16.mxu0 0
        %341 = vmatpush1.bf16.msra.mxu0 0
        %342 = vmatprep.subr.bf16.mxu0 0
        %343 = vmatpush1.bf16.msra.mxu0 0
        %344 = vmatprep.subr.bf16.mxu0 0
        %345 = vmatpush1.bf16.msra.mxu0 0
        %346 = vmatprep.subr.bf16.mxu0 0
        %347 = vmatpush1.bf16.msra.mxu0 0
        %348 = vmatprep.mubr.bf16.mxu0 0
        %349 = vmatmul.mubr.bf16.gmra.mrb[0].mxu0 %v264
        %v350 = vpop.f32.mrb[0].mxu0
        %v351 = vadd.f32 %v257, %v350
        %v352 = vpop.f32.mrb[0].mxu0
        %v353 = vpop.f32.mrb[0].mxu0
        %v354 = vadd.f32 %v257, %v353
        %v355 = vpop.f32.mrb[0].mxu0
        %356 = vmatprep.mubr.bf16.mxu0 0
        %357 = vmatmul.mubr.bf16.gmra.mrb[0].mxu0 %v265
        %v358 = vpop.f32.mrb[0].mxu0
        %v359 = vadd.f32 %v257, %v358
        %v360 = vpop.f32.mrb[0].mxu0
        %v361 = vpop.f32.mrb[0].mxu0
        %v362 = vpop.f32.mrb[0].mxu0
        %363 = vdwg.mxu0
        %vm364 = vcmp.lt.s32.totalorder %v225, 16
        %vm365 = vcmp.lt.s32.totalorder %v226, 16
        %vm366 = vcmp.lt.s32.totalorder %v227, 16
        %v367 = vsel %vm364, 1, 0
        %v368 = vsel %vm365, 1, 0
        %v369 = vsel %vm366, 1, 0
        %vm370 = vcmp.eq.s32.totalorder %v367, 1
        %vm371 = vcmp.eq.s32.totalorder %v368, 1
        %vm372 = vcmp.eq.s32.totalorder %v369, 1
        %v373 = vsel %vm370, %v351, 0.0
        %v374 = vsel %vm371, %v354, 0.0
        %v375 = vsel %vm372, %v359, 0.0
        %v376 = vrot.slane %v373, 6
        %v377 = vrot.slane %v374, 6
        %v378 = vrot.slane %v375, 6
        %vm379 = vcmp.lt.s32.totalorder %v225, 2
        %v380 = vsel %vm379, %v377, %v378
        %v381 = vsel %vm379, %v376, %v377
        %v382 = vsel %vm379, %v378, %v376
        %v383 = vlaneseq
        %v384 = vshrl.u32 %v383, 7
        %v385 = vsub.s32 4, %v384
        %v386 = vrot.slane %v236, %v385
        %v387 = vmul.f32 %v382, %v386
        %v388 = vmul.f32 %v381, %v386
        %v389 = vmul.f32 %v380, %v386
        %v390 = vrot.slane %v373, 7
        %v391 = vrot.slane %v374, 7
        %v392 = vrot.slane %v375, 7
        %vm393 = vcmp.lt.s32.totalorder %v225, 1
        %v394 = vsel %vm393, %v391, %v392
        %v395 = vsel %vm393, %v390, %v391
        %v396 = vsel %vm393, %v392, %v390
        %v397 = vlaneseq
        %v398 = vshrl.u32 %v397, 7
        %v399 = vsub.s32 5, %v398
        %v400 = vrot.slane %v236, %v399
        %v401 = vmul.f32 %v396, %v400
        %v402 = vmul.f32 %v395, %v400
        %v403 = vmul.f32 %v394, %v400
        %v404 = vadd.f32 %v387, %v401
        %v405 = vadd.f32 %v388, %v402
        %v406 = vadd.f32 %v389, %v403
        %v407 = vlaneseq
        %v408 = vshrl.u32 %v407, 7
        %v409 = vsub.s32 6, %v408
        %v410 = vrot.slane %v236, %v409
        %v411 = vmul.f32 %v373, %v410
        %v412 = vmul.f32 %v374, %v410
        %v413 = vmul.f32 %v375, %v410
        %v414 = vadd.f32 %v404, %v411
        %v415 = vadd.f32 %v405, %v412
        %v416 = vadd.f32 %v406, %v413
        %v417 = vrot.slane %v373, 1
        %v418 = vrot.slane %v374, 1
        %v419 = vrot.slane %v375, 1
        %vm420 = vcmp.lt.s32.totalorder %v225, 7
        %v421 = vsel %vm420, %v418, %v419
        %v422 = vsel %vm420, %v417, %v418
        %v423 = vsel %vm420, %v419, %v417
        %v424 = vlaneseq
        %v425 = vshrl.u32 %v424, 7
        %v426 = vsub.s32 7, %v425
        %v427 = vrot.slane %v236, %v426
        %v428 = vmul.f32 %v422, %v427
        %v429 = vmul.f32 %v421, %v427
        %v430 = vmul.f32 %v423, %v427
        %v431 = vadd.f32 %v414, %v428
        %v432 = vadd.f32 %v415, %v429
        %v433 = vadd.f32 %v416, %v430
        %v434 = vrot.slane %v373, 2
        %v435 = vrot.slane %v374, 2
        %v436 = vrot.slane %v375, 2
        %vm437 = vcmp.lt.s32.totalorder %v225, 6
        %v438 = vsel %vm437, %v435, %v436
        %v439 = vsel %vm437, %v434, %v435
        %v440 = vsel %vm437, %v436, %v434
        %v441 = vlaneseq
        %v442 = vshrl.u32 %v441, 7
        %v443 = vsub.s32 0, %v442
        %v444 = vrot.slane %v237, %v443
        %v445 = vmul.f32 %v439, %v444
        %v446 = vmul.f32 %v438, %v444
        %v447 = vmul.f32 %v440, %v444
        %v448 = vadd.f32 %v431, %v445
        %v449 = vadd.f32 %v432, %v446
        %v450 = vadd.f32 %v433, %v447
        %v451 = vlaneseq
        %v452 = vshrl.u32 %v451, 7
        %v453 = vsub.s32 1, %v452
        %v454 = vrot.slane %v236, %v453
        %v455 = vadd.f32 %v448, %v454
        %v456 = vadd.f32 %v449, %v454
        %v457 = vadd.f32 %v450, %v454
        %vm458 = vcmp.ge.f32.partialorder %v455, 0.0
        %vm459 = vcmp.ge.f32.partialorder %v456, 0.0
        %vm460 = vcmp.ge.f32.partialorder %v457, 0.0
        %v461 = vmul.f32 %v455, 0.3
        %v462 = vmul.f32 %v456, 0.3
        %v463 = vmul.f32 %v457, 0.3
        %v464 = vsel %vm458, %v455, %v461
        %v465 = vsel %vm459, %v456, %v462
        %v466 = vsel %vm460, %v457, %v463
        %v467 = vmul.f32 %v464, %v232
        %v468 = vmul.f32 %v465, %v232
        %v469 = vmul.f32 %v466, %v232
        %470 = vadd.xlane.f32.xlu0 %v467
        %v471 = vpop.xlane.xlu0 %470
        %472 = vadd.xlane.f32.xlu0 %v468
        %v473 = vpop.xlane.xlu0 %472
        %474 = vadd.xlane.f32.xlu0 %v469
        %v475 = vpop.xlane.xlu0 %474
        %v476 = vmul.f32 %v471, 0.03125
        %v477 = vmul.f32 %v473, 0.03125
        %v478 = vmul.f32 %v475, 0.03125
        %v479 = vsub.f32 %v464, %v476
        %v480 = vsub.f32 %v465, %v477
        %v481 = vsub.f32 %v466, %v478
        %v482 = vmul.f32 %v479, %v232
        %v483 = vmul.f32 %v480, %v232
        %v484 = vmul.f32 %v481, %v232
        %v485 = vmul.f32 %v482, %v482
        %v486 = vmul.f32 %v483, %v483
        %v487 = vmul.f32 %v484, %v484
        %488 = vadd.xlane.f32.xlu0 %v485
        %v489 = vpop.xlane.xlu0 %488
        %490 = vadd.xlane.f32.xlu0 %v486
        %v491 = vpop.xlane.xlu0 %490
        %492 = vadd.xlane.f32.xlu0 %v487
        %v493 = vpop.xlane.xlu0 %492
        %v494 = vmul.f32 %v489, 0.03125
        %v495 = vmul.f32 %v491, 0.03125
        %v496 = vmul.f32 %v493, 0.03125
        %v497 = vadd.f32 %v494, 1e-05
        %v498 = vadd.f32 %v495, 1e-05
        %v499 = vadd.f32 %v496, 1e-05
        %v500 = vrsqrt.pop %v497
        %v501 = vrsqrt.pop %v498
        %v502 = vrsqrt.pop %v499
        %v503 = vmul.f32 %v482, %v500
        %v504 = vmul.f32 %v483, %v501
        %v505 = vmul.f32 %v484, %v502
        %v506 = vlaneseq
        %v507 = vshrl.u32 %v506, 7
        %v508 = vsub.s32 2, %v507
        %v509 = vrot.slane %v236, %v508
        %v510 = vmul.f32 %v503, %v509
        %v511 = vmul.f32 %v504, %v509
        %v512 = vmul.f32 %v505, %v509
        %v513 = vlaneseq
        %v514 = vshrl.u32 %v513, 7
        %v515 = vsub.s32 3, %v514
        %v516 = vrot.slane %v236, %v515
        %v517 = vadd.f32 %v510, %v516
        %v518 = vadd.f32 %v511, %v516
        %v519 = vadd.f32 %v512, %v516
        %s520 = scalar_lea.vmem [#allocation9], 16
        %v521 = vld [vmem:[%s520] sm:$0xff]
        %v522 = vld [vmem:[%s520 + $0x8] sm:$0xff]
        %v523 = vpack.c.bf16 %v518, %v517
        %v524 = vpack.c.bf16 %v519, %v519
        %s525 = scalar_lea.vmem [#allocation7], 64
        %v526 = vld [vmem:[%s525] sm:$0xf]
        %v527 = vld [vmem:[%s525 + $0x4] sm:$0xf]
        %v528 = vld [vmem:[%s525 + $0x8] sm:$0xf]
        %v529 = vld [vmem:[%s525 + $0xc] sm:$0xf]
        %v530 = vld [vmem:[%s525 + $0x10] sm:$0xf]
        %v531 = vld [vmem:[%s525 + $0x14] sm:$0xf]
        %v532 = vld [vmem:[%s525 + $0x18] sm:$0xf]
        %v533 = vld [vmem:[%s525 + $0x1c] sm:$0xf]
        %v534 = vld [vmem:[%s525 + $0x20] sm:$0xf]
        %v535 = vld [vmem:[%s525 + $0x24] sm:$0xf]
        %v536 = vld [vmem:[%s525 + $0x28] sm:$0xf]
        %v537 = vld [vmem:[%s525 + $0x2c] sm:$0xf]
        %v538 = vld [vmem:[%s525 + $0x30] sm:$0xf]
        %v539 = vld [vmem:[%s525 + $0x34] sm:$0xf]
        %v540 = vld [vmem:[%s525 + $0x38] sm:$0xf]
        %v541 = vld [vmem:[%s525 + $0x3c] sm:$0xf]
        %v542 = vlaneseq
        %v543 = vshrl.u32 %v542, 7
        %v544 = vsub.s32 0, %v543
        %v545 = vrot.slane %v521, %v544
        %v562 = vunpack.c.l.b16 %v526
        %v563 = vunpack.c.l.b16 %v527
        %v564 = vunpack.c.l.b16 %v528
        %v565 = vunpack.c.l.b16 %v529
        %v566 = vunpack.c.l.b16 %v530
        %v567 = vunpack.c.l.b16 %v531
        %v568 = vunpack.c.l.b16 %v532
        %v569 = vunpack.c.l.b16 %v533
        %v570 = vunpack.c.l.b16 %v534
        %v571 = vunpack.c.l.b16 %v535
        %v572 = vunpack.c.l.b16 %v536
        %v573 = vunpack.c.l.b16 %v537
        %v574 = vunpack.c.l.b16 %v538
        %v575 = vunpack.c.l.b16 %v539
        %v576 = vunpack.c.l.b16 %v540
        %v577 = vunpack.c.l.b16 %v541
        %v578 = vpack.c.b16 %v563, %v562
        %v579 = vpack.c.b16 %v565, %v564
        %v580 = vpack.c.b16 %v567, %v566
        %v581 = vpack.c.b16 %v569, %v568
        %v582 = vpack.c.b16 %v571, %v570
        %v583 = vpack.c.b16 %v573, %v572
        %v584 = vpack.c.b16 %v575, %v574
        %v585 = vpack.c.b16 %v577, %v576
        %594 = vmatprep.subr.bf16.mxu0 0
        %595 = vmatpush1.bf16.msra.mxu0 %v578
        %596 = vmatprep.subr.bf16.mxu0 0
        %597 = vmatpush1.bf16.msra.mxu0 %v579
        %598 = vmatprep.subr.bf16.mxu0 0
        %599 = vmatpush1.bf16.msra.mxu0 %v580
        %600 = vmatprep.subr.bf16.mxu0 0
        %601 = vmatpush1.bf16.msra.mxu0 %v581
        %602 = vmatprep.subr.bf16.mxu0 0
        %603 = vmatpush1.bf16.msra.mxu0 %v582
        %604 = vmatprep.subr.bf16.mxu0 0
        %605 = vmatpush1.bf16.msra.mxu0 %v583
        %606 = vmatprep.subr.bf16.mxu0 0
        %607 = vmatpush1.bf16.msra.mxu0 %v584
        %608 = vmatprep.subr.bf16.mxu0 0
        %609 = vmatpush1.bf16.msra.mxu0 %v585
        %610 = vmatprep.subr.bf16.mxu0 0
        %611 = vmatpush1.bf16.msra.mxu0 0
        %612 = vmatprep.subr.bf16.mxu0 0
        %613 = vmatpush1.bf16.msra.mxu0 0
        %614 = vmatprep.subr.bf16.mxu0 0
        %615 = vmatpush1.bf16.msra.mxu0 0
        %616 = vmatprep.subr.bf16.mxu0 0
        %617 = vmatpush1.bf16.msra.mxu0 0
        %618 = vmatprep.subr.bf16.mxu0 0
        %619 = vmatpush1.bf16.msra.mxu0 0
        %620 = vmatprep.subr.bf16.mxu0 0
        %621 = vmatpush1.bf16.msra.mxu0 0
        %622 = vmatprep.subr.bf16.mxu0 0
        %623 = vmatpush1.bf16.msra.mxu0 0
        %624 = vmatprep.subr.bf16.mxu0 0
        %625 = vmatpush1.bf16.msra.mxu0 0
        %626 = vmatprep.mubr.bf16.mxu0 0
        %627 = vmatmul.mubr.bf16.gmra.mrb[0].mxu0 %v523
        %v628 = vpop.f32.mrb[0].mxu0
        %v629 = vadd.f32 %v545, %v628
        %v630 = vpop.f32.mrb[0].mxu0
        %v631 = vpop.f32.mrb[0].mxu0
        %v632 = vadd.f32 %v545, %v631
        %v633 = vpop.f32.mrb[0].mxu0
        %634 = vmatprep.mubr.bf16.mxu0 0
        %635 = vmatmul.mubr.bf16.gmra.mrb[0].mxu0 %v524
        %v636 = vpop.f32.mrb[0].mxu0
        %v637 = vadd.f32 %v545, %v636
        %v638 = vpop.f32.mrb[0].mxu0
        %v639 = vpop.f32.mrb[0].mxu0
        %v640 = vpop.f32.mrb[0].mxu0
        %641 = vdwg.mxu0
        %v642 = vsel %vm370, %v629, 0.0
        %v643 = vsel %vm371, %v632, 0.0
        %v644 = vsel %vm372, %v637, 0.0
        %v645 = vrot.slane %v642, 6
        %v646 = vrot.slane %v643, 6
        %v647 = vrot.slane %v644, 6
        %v648 = vsel %vm379, %v646, %v647
        %v649 = vsel %vm379, %v645, %v646
        %v650 = vsel %vm379, %v647, %v645
        %v651 = vlaneseq
        %v652 = vshrl.u32 %v651, 7
        %v653 = vsub.s32 4, %v652
        %v654 = vrot.slane %v521, %v653
        %v655 = vmul.f32 %v650, %v654
        %v656 = vmul.f32 %v649, %v654
        %v657 = vmul.f32 %v648, %v654
        %v658 = vrot.slane %v642, 7
        %v659 = vrot.slane %v643, 7
        %v660 = vrot.slane %v644, 7
        %v661 = vsel %vm393, %v659, %v660
        %v662 = vsel %vm393, %v658, %v659
        %v663 = vsel %vm393, %v660, %v658
        %v664 = vlaneseq
        %v665 = vshrl.u32 %v664, 7
        %v666 = vsub.s32 5, %v665
        %v667 = vrot.slane %v521, %v666
        %v668 = vmul.f32 %v663, %v667
        %v669 = vmul.f32 %v662, %v667
        %v670 = vmul.f32 %v661, %v667
        %v671 = vadd.f32 %v655, %v668
        %v672 = vadd.f32 %v656, %v669
        %v673 = vadd.f32 %v657, %v670
        %v674 = vlaneseq
        %v675 = vshrl.u32 %v674, 7
        %v676 = vsub.s32 6, %v675
        %v677 = vrot.slane %v521, %v676
        %v678 = vmul.f32 %v642, %v677
        %v679 = vmul.f32 %v643, %v677
        %v680 = vmul.f32 %v644, %v677
        %v681 = vadd.f32 %v671, %v678
        %v682 = vadd.f32 %v672, %v679
        %v683 = vadd.f32 %v673, %v680
        %v684 = vrot.slane %v642, 1
        %v685 = vrot.slane %v643, 1
        %v686 = vrot.slane %v644, 1
        %v687 = vsel %vm420, %v685, %v686
        %v688 = vsel %vm420, %v684, %v685
        %v689 = vsel %vm420, %v686, %v684
        %v690 = vlaneseq
        %v691 = vshrl.u32 %v690, 7
        %v692 = vsub.s32 7, %v691
        %v693 = vrot.slane %v521, %v692
        %v694 = vmul.f32 %v688, %v693
        %v695 = vmul.f32 %v687, %v693
        %v696 = vmul.f32 %v689, %v693
        %v697 = vadd.f32 %v681, %v694
        %v698 = vadd.f32 %v682, %v695
        %v699 = vadd.f32 %v683, %v696
        %v700 = vrot.slane %v642, 2
        %v701 = vrot.slane %v643, 2
        %v702 = vrot.slane %v644, 2
        %v703 = vsel %vm437, %v701, %v702
        %v704 = vsel %vm437, %v700, %v701
        %v705 = vsel %vm437, %v702, %v700
        %v706 = vlaneseq
        %v707 = vshrl.u32 %v706, 7
        %v708 = vsub.s32 0, %v707
        %v709 = vrot.slane %v522, %v708
        %v710 = vmul.f32 %v704, %v709
        %v711 = vmul.f32 %v703, %v709
        %v712 = vmul.f32 %v705, %v709
        %v713 = vadd.f32 %v697, %v710
        %v714 = vadd.f32 %v698, %v711
        %v715 = vadd.f32 %v699, %v712
        %v716 = vlaneseq
        %v717 = vshrl.u32 %v716, 7
        %v718 = vsub.s32 1, %v717
        %v719 = vrot.slane %v521, %v718
        %v720 = vadd.f32 %v713, %v719
        %v721 = vadd.f32 %v714, %v719
        %v722 = vadd.f32 %v715, %v719
        %vm723 = vcmp.ge.f32.partialorder %v720, 0.0
        %vm724 = vcmp.ge.f32.partialorder %v721, 0.0
        %vm725 = vcmp.ge.f32.partialorder %v722, 0.0
        %v726 = vmul.f32 %v720, 0.3
        %v727 = vmul.f32 %v721, 0.3
        %v728 = vmul.f32 %v722, 0.3
        %v729 = vsel %vm723, %v720, %v726
        %v730 = vsel %vm724, %v721, %v727
        %v731 = vsel %vm725, %v722, %v728
        %v732 = vmul.f32 %v729, %v232
        %v733 = vmul.f32 %v730, %v232
        %v734 = vmul.f32 %v731, %v232
        %735 = vadd.xlane.f32.xlu0 %v732
        %v736 = vpop.xlane.xlu0 %735
        %737 = vadd.xlane.f32.xlu0 %v733
        %v738 = vpop.xlane.xlu0 %737
        %739 = vadd.xlane.f32.xlu0 %v734
        %v740 = vpop.xlane.xlu0 %739
        %v741 = vmul.f32 %v736, 0.03125
        %v742 = vmul.f32 %v738, 0.03125
        %v743 = vmul.f32 %v740, 0.03125
        %v744 = vsub.f32 %v729, %v741
        %v745 = vsub.f32 %v730, %v742
        %v746 = vsub.f32 %v731, %v743
        %v747 = vmul.f32 %v744, %v232
        %v748 = vmul.f32 %v745, %v232
        %v749 = vmul.f32 %v746, %v232
        %v750 = vmul.f32 %v747, %v747
        %v751 = vmul.f32 %v748, %v748
        %v752 = vmul.f32 %v749, %v749
        %753 = vadd.xlane.f32.xlu0 %v750
        %v754 = vpop.xlane.xlu0 %753
        %755 = vadd.xlane.f32.xlu0 %v751
        %v756 = vpop.xlane.xlu0 %755
        %757 = vadd.xlane.f32.xlu0 %v752
        %v758 = vpop.xlane.xlu0 %757
        %v759 = vmul.f32 %v754, 0.03125
        %v760 = vmul.f32 %v756, 0.03125
        %v761 = vmul.f32 %v758, 0.03125
        %v762 = vadd.f32 %v759, 1e-05
        %v763 = vadd.f32 %v760, 1e-05
        %v764 = vadd.f32 %v761, 1e-05
        %v765 = vrsqrt.pop %v762
        %v766 = vrsqrt.pop %v763
        %v767 = vrsqrt.pop %v764
        %v768 = vmul.f32 %v747, %v765
        %v769 = vmul.f32 %v748, %v766
        %v770 = vmul.f32 %v749, %v767
        %v771 = vlaneseq
        %v772 = vshrl.u32 %v771, 7
        %v773 = vsub.s32 2, %v772
        %v774 = vrot.slane %v521, %v773
        %v775 = vmul.f32 %v768, %v774
        %v776 = vmul.f32 %v769, %v774
        %v777 = vmul.f32 %v770, %v774
        %v778 = vlaneseq
        %v779 = vshrl.u32 %v778, 7
        %v780 = vsub.s32 3, %v779
        %v781 = vrot.slane %v521, %v780
        %v782 = vadd.f32 %v775, %v781
        %v783 = vadd.f32 %v776, %v781
        %v784 = vadd.f32 %v777, %v781
        %s785 = sld [smem:[#allocation3 + %s26]]
        %v786 = vstv %s785
        %vm787 = vcmp.lt.s32.totalorder %v225, %v786
        %vm788 = vcmp.lt.s32.totalorder %v226, %v786
        %vm789 = vcmp.lt.s32.totalorder %v227, %v786
        %v790 = vsel %vm787, 1, 0
        %v791 = vsel %vm788, 1, 0
        %v792 = vsel %vm789, 1, 0
        %vm793 = vcmp.eq.s32.totalorder %v790, 1
        %vm794 = vcmp.eq.s32.totalorder %v791, 1
        %vm795 = vcmp.eq.s32.totalorder %v792, 1
        %v796 = vsel %vm793, %v782, 0.0
        %v797 = vsel %vm794, %v783, 0.0
        %v798 = vsel %vm795, %v784, 0.0
        %v799 = vpack.c.bf16 %v797, %v796
        %v800 = vpack.c.bf16 %v798, %v798
        %v803 = vunpack.c.l.b16 %v799
        %v804 = vunpack.c.h.b16 %v799
        %v805 = vunpack.c.l.b16 %v800
        %v806 = vpack.c.b16 %v803, %v803
        %v807 = vpack.c.b16 %v804, %v804
        %v808 = vpack.c.b16 %v805, %v805
        %812 = vst [vmem:[%s222] sm:$0xf] %v806
        %813 = vst [vmem:[%s222 + $0x4] sm:$0xf] %v807
        %814 = vst [vmem:[%s222 + $0x8] sm:$0xf] %v808
        %s815 = sand.u32 %s102, 1
        %s816 = scalar_lea.sflag [#allocation6], %s815
        %s817 = sand.u32 %s102, 1
        %s818 = smul.addr %s817, 12
        %s819 = scalar_lea.vmem [#allocation10], %s818
        // Predicated region
        $region45: #{tpu_custom_call.1} parent=31 // pred_check
          %p820 = pneg %p112
        $region46: #{tpu_custom_call.1} parent=31 // pred_check_branch
          %822 = sbr.rel (%p820) target = $region48
        $region47: #{tpu_custom_call.1} parent=31 // pred_region
          %s824 = ssub.s32 192, 192
          %825 = vsyncadd %s816, %s824
          %s826 = smul.addr %s26, 3
          %s827 = smul.addr %s826, 64
          %s828 = scalar_lea.hbm %s4, %s827
          %s829 = sshll.u32 %s819, 4
          %s830 = int_to_ptr.vmem [resolvable:$true] %s829
          %835 = dma.vmem_to_hbm [thread:$0]  %s830, 192, %s828, %s816, 64, 64, 4
        $region48: #{tpu_custom_call.1} parent=31 // pred_fallthru
          _
      $region32: #{tpu_custom_call.1} parent=5 // pred_fallthru
        _
      %p836 = scmp.le.s32.totalorder 2, %s21
      // Predicated region
      $region49: #{tpu_custom_call.1} parent=5 // pred_check
        %p837 = pneg %p836
      $region50: #{tpu_custom_call.1} parent=5 // pred_check_branch
        %839 = sbr.rel (%p837) target = $region52
      $region51: #{tpu_custom_call.1} parent=5 // pred_region
        %s840 = ssub.s32 %s21, 2
        // Predicated region
        $region53: #{tpu_custom_call.1} parent=51 // pred_check
          %p841 = pneg %p118
        $region54: #{tpu_custom_call.1} parent=51 // pred_check_branch
          %843 = sbr.rel (%p841) target = $region56
        $region55: #{tpu_custom_call.1} parent=51 // pred_region
          %s844 = sand.u32 %s103, 1
          %s845 = scalar_lea.sflag [#allocation6], %s844
          %s846 = sand.u32 %s103, 1
          %s847 = smul.addr %s846, 12
          %s848 = scalar_lea.vmem [#allocation10], %s847
          %849 = dma.done %s845, 192
        $region56: #{tpu_custom_call.1} parent=51 // pred_fallthru
          _
      $region52: #{tpu_custom_call.1} parent=5 // pred_fallthru
        _
    $region6: #{tpu_custom_call.1} parent=1 // loop_footer
      %s25 = sadd.s32 1, %s21
    $region7: #{tpu_custom_call.1} parent=1 // loop_footer_branch
      %20 = sbr.rel target = $region3
    $region8: #{tpu_custom_call.1} parent=1 // loop_exit
      _
    %850 = vsyncpa [#allocation5], 1
    %s851 = scalar_lea.sflag [#allocation5], 1
    %852 = vsyncpa %s851, 1
    %853 = vsyncpa [#allocation8], 1
    %854 = vsyncpa [#allocation6], 1
    %s855 = scalar_lea.sflag [#allocation6], 1
    %856 = vsyncpa %s855, 1

// kernel: tpu_custom_call.1
$region0: #{tpu_custom_call.1}
  #allocation0 [shape = 'u32[]', space=smem, size = 0x4, offset = 0x4, fixed_abs, tag = 'smem constant byte address 0x4 - core index']
  #allocation1 [shape = 'u32[144,128]{1,0:T(1,128)}', space=vmem, size = 0x12000, scoped, tag = 'internal scratch']
  #allocation2 [shape = 's32[1]{0}', space=sflag, size = 0x4, scoped, tag = 'scoped memory for tpu_custom_call.1']
  #allocation3 [shape = 'u8[512]{0}', space=smem, size = 0x200, scoped, tag = 'prefetched SMEM operand 0']
  %s0 = inlined_call_operand.hbm [shape: s32[2], index: 0, kind: input, shape index: {}]
  %s1 = inlined_call_operand.hbm [shape: bf16[2,24,128], index: 1, kind: input, shape index: {}]
  %s2 = inlined_call_operand.hbm [shape: bf16[2,128,128], index: 2, kind: input, shape index: {}]
  %s3 = inlined_call_operand.hbm [shape: f32[2,16,128], index: 3, kind: input, shape index: {}]
  %s4 = inlined_call_operand.hbm [shape: bf16[2,24,128], index: 4, kind: output, shape index: {}]
  %s5 = sld [smem:[#allocation0]]
  $region57: #{tpu_custom_call.1} parent=0
    _
  %s7 = ssub.s32 1, %s5
  %s8 = scalar_select 0, %s7, %s5
  %10 = dma.hbm_to_smem %s0, 16, [#allocation3], [#allocation2]
  %11 = dma.done [#allocation2], 16
  %12 = sfence
  $region1: #{tpu_custom_call.1} parent=0
    #allocation4 [shape = 'u8[12288]{0}', space=vmem, size = 0x3000, scoped, tag = 'input window, operand 1']
    #allocation5 [shape = 's32[2]{0}', space=sflag, size = 0x8, scoped, tag = 'scoped memory for tpu_custom_call.1']
    #allocation6 [shape = 's32[2]{0}', space=sflag, size = 0x8, scoped, tag = 'scoped memory for tpu_custom_call.1']
    #allocation7 [shape = 'u8[65536]{0}', space=vmem, size = 0x10000, scoped, tag = 'input window, operand 2, single buffered']
    #allocation8 [shape = 's32[1]{0}', space=sflag, size = 0x4, scoped, tag = 'scoped memory for tpu_custom_call.1']
    #allocation9 [shape = 'u8[16384]{0}', space=vmem, size = 0x4000, scoped, tag = 'input window, operand 3, single buffered']
    #allocation10 [shape = 'u8[12288]{0}', space=vmem, size = 0x3000, scoped, tag = 'output window, operand 0']
    %13 = vsyncpa [#allocation5], 0
    %s14 = scalar_lea.sflag [#allocation5], 1
    %15 = vsyncpa %s14, 0
    %16 = vsyncpa [#allocation8], 0
    %17 = vsyncpa [#allocation6], 0
    %s18 = scalar_lea.sflag [#allocation6], 1
    %19 = vsyncpa %s18, 0
    loop: start=0, step=1, limit=4
    $region2: #{tpu_custom_call.1} parent=1 // loop_pre_header
      _
    $region3: #{tpu_custom_call.1} parent=1 // loop_header
      %s21 = sphi 0, %s25
      %p22 = scmp.ge.s32.totalorder %s21, 4
      %s31 = sphi 0, %s33
      %s34 = sphi 0, %s31
      %s35 = sphi 0, %s34
      %s51 = sphi 0, %s35
      %s55 = sphi 0, %s55
      %s57 = sphi 0, %s55
      %s58 = sphi 0, %s57
      %s72 = sphi 0, %s58
      %s76 = sphi 0, %s76
      %s78 = sphi 0, %s76
      %s79 = sphi 0, %s78
      %s93 = sphi 0, %s79
      %s99 = sphi 0, %s101
      %s102 = sphi 0, %s99
      %s103 = sphi 0, %s102
      %s119 = sphi 0, %s103
    $region4: #{tpu_custom_call.1} parent=1 // loop_header_branch
      %24 = sbr.rel (%p22) target = $region8
    $region5: #{tpu_custom_call.1} parent=1 // loop_body
      %s26 = ssub.s32 %s21, 1
      %s27 = ssub.s32 %s21, 2
      %s28 = sadd.s32 %s21, 1
      %s29 = ssub.s32 %s21, %s28
      %p30 = scmp.eq.s32.totalorder %s29, 0
      %s32 = sadd.s32 %s31, 1
      %s33 = scalar_select %p30, %s31, %s32
      %p36 = pneg %p30
      %p37 = scmp.eq.s32.totalorder %s21, 1
      %p38 = por %p36, %p37
      %p39 = scmp.ne.s32.totalorder %s31, %s34
      %p40 = scmp.eq.s32.totalorder %s21, 0
      %p41 = por %p39, %p40
      %p42 = scmp.ne.s32.totalorder %s31, %s34
      %p43 = scmp.eq.s32.totalorder %s26, 1
      %p44 = por %p42, %p43
      %p45 = scmp.ne.s32.totalorder %s34, %s35
      %p46 = scmp.eq.s32.totalorder %s26, 0
      %p47 = por %p45, %p46
      %p48 = scmp.ne.s32.totalorder %s34, %s35
      %p49 = scmp.eq.s32.totalorder %s27, 1
      %p50 = por %p48, %p49
      %p52 = scmp.ne.s32.totalorder %s35, %s51
      %p53 = scmp.eq.s32.totalorder %s27, 0
      %p54 = por %p52, %p53
      %s56 = sadd.s32 %s55, 1
      %p59 = scmp.eq.s32.totalorder %s21, 1
      %p60 = scmp.ne.s32.totalorder %s55, %s57
      %p61 = scmp.eq.s32.totalorder %s21, 0
      %p62 = por %p60, %p61
      %p63 = scmp.ne.s32.totalorder %s55, %s57
      %p64 = scmp.eq.s32.totalorder %s26, 1
      %p65 = por %p63, %p64
      %p66 = scmp.ne.s32.totalorder %s57, %s58
      %p67 = scmp.eq.s32.totalorder %s26, 0
      %p68 = por %p66, %p67
      %p69 = scmp.ne.s32.totalorder %s57, %s58
      %p70 = scmp.eq.s32.totalorder %s27, 1
      %p71 = por %p69, %p70
      %p73 = scmp.ne.s32.totalorder %s58, %s72
      %p74 = scmp.eq.s32.totalorder %s27, 0
      %p75 = por %p73, %p74
      %s77 = sadd.s32 %s76, 1
      %p80 = scmp.eq.s32.totalorder %s21, 1
      %p81 = scmp.ne.s32.totalorder %s76, %s78
      %p82 = scmp.eq.s32.totalorder %s21, 0
      %p83 = por %p81, %p82
      %p84 = scmp.ne.s32.totalorder %s76, %s78
      %p85 = scmp.eq.s32.totalorder %s26, 1
      %p86 = por %p84, %p85
      %p87 = scmp.ne.s32.totalorder %s78, %s79
      %p88 = scmp.eq.s32.totalorder %s26, 0
      %p89 = por %p87, %p88
      %p90 = scmp.ne.s32.totalorder %s78, %s79
      %p91 = scmp.eq.s32.totalorder %s27, 1
      %p92 = por %p90, %p91
      %p94 = scmp.ne.s32.totalorder %s79, %s93
      %p95 = scmp.eq.s32.totalorder %s27, 0
      %p96 = por %p94, %p95
      %s97 = ssub.s32 %s21, %s28
      %p98 = scmp.eq.s32.totalorder %s97, 0
      %s100 = sadd.s32 %s99, 1
      %s101 = scalar_select %p98, %s99, %s100
      %p104 = pneg %p98
      %p105 = scmp.eq.s32.totalorder %s21, 1
      %p106 = por %p104, %p105
      %p107 = scmp.ne.s32.totalorder %s99, %s102
      %p108 = scmp.eq.s32.totalorder %s21, 0
      %p109 = por %p107, %p108
      %p110 = scmp.ne.s32.totalorder %s99, %s102
      %p111 = scmp.eq.s32.totalorder %s26, 1
      %p112 = por %p110, %p111
      %p113 = scmp.ne.s32.totalorder %s102, %s103
      %p114 = scmp.eq.s32.totalorder %s26, 0
      %p115 = por %p113, %p114
      %p116 = scmp.ne.s32.totalorder %s102, %s103
      %p117 = scmp.eq.s32.totalorder %s27, 1
      %p118 = por %p116, %p117
      %p120 = scmp.ne.s32.totalorder %s103, %s119
      %p121 = scmp.eq.s32.totalorder %s27, 0
      %p122 = por %p120, %p121
      %p123 = scmp.le.s32.totalorder 1, %s21
      %p124 = scmp.lt.s32.totalorder %s21, 3
      %p125 = pnand %p123, %p124
      %p126 = pneg %p125
      // Predicated region
      $region9: #{tpu_custom_call.1} parent=5 // pred_check
        _
      $region10: #{tpu_custom_call.1} parent=5 // pred_check_branch
        %128 = sbr.rel (%p125) target = $region12
      $region11: #{tpu_custom_call.1} parent=5 // pred_region
        %s129 = ssub.s32 %s21, 1
        // Predicated region
        $region13: #{tpu_custom_call.1} parent=11 // pred_check
          %p130 = pneg %p68
        $region14: #{tpu_custom_call.1} parent=11 // pred_check_branch
          %132 = sbr.rel (%p130) target = $region16
        $region15: #{tpu_custom_call.1} parent=11 // pred_region
          %s134 = ssub.s32 2048, 2048
          %135 = vsyncadd [#allocation8], %s134
          %s136 = sshll.u32 [#allocation7], 4
          %s137 = int_to_ptr.vmem [resolvable:$true] %s136
          %142 = dma.hbm_to_vmem [thread:$0]  %s2, 2048, %s137, [#allocation8], 64, 64, 4
        $region16: #{tpu_custom_call.1} parent=11 // pred_fallthru
          _
        // Predicated region
        $region17: #{tpu_custom_call.1} parent=11 // pred_check
          %p143 = pneg %p89
        $region18: #{tpu_custom_call.1} parent=11 // pred_check_branch
          %145 = sbr.rel (%p143) target = $region20
        $region19: #{tpu_custom_call.1} parent=11 // pred_region
          %s147 = ssub.s32 512, 512
          %148 = vsyncadd [#allocation8], %s147
          %s149 = sshll.u32 [#allocation9], 4
          %s150 = int_to_ptr.vmem [resolvable:$true] %s149
          %155 = dma.hbm_to_vmem [thread:$0]  %s3, 512, %s150, [#allocation8], 128, 128, 8
        $region20: #{tpu_custom_call.1} parent=11 // pred_fallthru
          _
      $region12: #{tpu_custom_call.1} parent=5 // pred_fallthru
        _
      %p156 = scmp.lt.s32.totalorder %s21, 2
      // Predicated region
      $region21: #{tpu_custom_call.1} parent=5 // pred_check
        %p157 = pneg %p156
      $region22: #{tpu_custom_call.1} parent=5 // pred_check_branch
        %159 = sbr.rel (%p157) target = $region24
      $region23: #{tpu_custom_call.1} parent=5 // pred_region
        // Predicated region
        $region25: #{tpu_custom_call.1} parent=23 // pred_check
          %p160 = pneg %p41
        $region26: #{tpu_custom_call.1} parent=23 // pred_check_branch
          %162 = sbr.rel (%p160) target = $region28
        $region27: #{tpu_custom_call.1} parent=23 // pred_region
          %s163 = sand.u32 %s31, 1
          %s164 = scalar_lea.sflag [#allocation5], %s163
          %s165 = sand.u32 %s31, 1
          %s166 = smul.addr %s165, 12
          %s167 = scalar_lea.vmem [#allocation4], %s166
          %s169 = ssub.s32 192, 192
          %170 = vsyncadd %s164, %s169
          %s171 = smul.addr %s21, 3
          %s172 = smul.addr %s171, 64
          %s173 = scalar_lea.hbm %s1, %s172
          %s174 = sshll.u32 %s167, 4
          %s175 = int_to_ptr.vmem [resolvable:$true] %s174
          %180 = dma.hbm_to_vmem [thread:$0]  %s173, 192, %s175, %s164, 64, 64, 4
        $region28: #{tpu_custom_call.1} parent=23 // pred_fallthru
          _
      $region24: #{tpu_custom_call.1} parent=5 // pred_fallthru
        _
      %p181 = scmp.le.s32.totalorder 1, %s21
      %p182 = scmp.lt.s32.totalorder %s21, 3
      %p183 = pnand %p181, %p182
      %p184 = pneg %p183
      // Predicated region
      $region29: #{tpu_custom_call.1} parent=5 // pred_check
        _
      $region30: #{tpu_custom_call.1} parent=5 // pred_check_branch
        %186 = sbr.rel (%p183) target = $region32
      $region31: #{tpu_custom_call.1} parent=5 // pred_region
        %s187 = ssub.s32 %s21, 1
        %s188 = sand.u32 %s34, 1
        %s189 = scalar_lea.sflag [#allocation5], %s188
        %s190 = sand.u32 %s34, 1
        %s191 = smul.addr %s190, 12
        %s192 = scalar_lea.vmem [#allocation4], %s191
        // Predicated region
        $region33: #{tpu_custom_call.1} parent=31 // pred_check
          %p193 = pneg %p47
        $region34: #{tpu_custom_call.1} parent=31 // pred_check_branch
          %195 = sbr.rel (%p193) target = $region36
        $region35: #{tpu_custom_call.1} parent=31 // pred_region
          %196 = dma.done %s189, 192
        $region36: #{tpu_custom_call.1} parent=31 // pred_fallthru
          _
        // Predicated region
        $region37: #{tpu_custom_call.1} parent=31 // pred_check
          %p197 = pneg %p68
        $region38: #{tpu_custom_call.1} parent=31 // pred_check_branch
          %199 = sbr.rel (%p197) target = $region40
        $region39: #{tpu_custom_call.1} parent=31 // pred_region
          %200 = dma.done [#allocation8], 2048
        $region40: #{tpu_custom_call.1} parent=31 // pred_fallthru
          _
        // Predicated region
        $region41: #{tpu_custom_call.1} parent=31 // pred_check
          %p201 = pneg %p89
        $region42: #{tpu_custom_call.1} parent=31 // pred_check_branch
          %203 = sbr.rel (%p201) target = $region44
        $region43: #{tpu_custom_call.1} parent=31 // pred_region
          %204 = dma.done [#allocation8], 512
        $region44: #{tpu_custom_call.1} parent=31 // pred_fallthru
          _
        %s205 = sand.u32 %s34, 1
        %s206 = scalar_lea.sflag [#allocation5], %s205
        %s207 = sand.u32 %s34, 1
        %s208 = smul.addr %s207, 12
        %s209 = scalar_lea.vmem [#allocation4], %s208
        %p210 = pneg %p47
        %p211 = pneg %p44
        %p212 = pneg %p68
        %p213 = pneg %p65
        %p214 = pneg %p89
        %p215 = pneg %p86
        %p216 = pneg %p115
        %p217 = pneg %p112
        %s218 = sand.u32 %s102, 1
        %s219 = scalar_lea.sflag [#allocation6], %s218
        %s220 = sand.u32 %s102, 1
        %s221 = smul.addr %s220, 12
        %s222 = scalar_lea.vmem [#allocation10], %s221
        %v224 = vlaneseq
        %v225 = vshrl.u32 %v224, 7
        %v226 = vadd.s32 %v225, 8
        %v227 = vadd.s32 %v225, 16
        %v228 = vlaneseq
        %v229 = vand.u32 %v228, 127
        %vm230 = vcmp.lt.s32.totalorder %v229, 32
        %v231 = vsel %vm230, 1, 0
        %v232 = vcvt.s32.f32 %v231
        %v233 = vld [vmem:[%s192] sm:$0xf]
        %v234 = vld [vmem:[%s192 + $0x4] sm:$0xf]
        %v235 = vld [vmem:[%s192 + $0x8] sm:$0xf]
        %v236 = vld [vmem:[#allocation9] sm:$0xff]
        %v237 = vld [vmem:[#allocation9 + $0x8] sm:$0xff]
        %v238 = vld [vmem:[#allocation7] sm:$0xf]
        %v239 = vld [vmem:[#allocation7 + $0x4] sm:$0xf]
        %v240 = vld [vmem:[#allocation7 + $0x8] sm:$0xf]
        %v241 = vld [vmem:[#allocation7 + $0xc] sm:$0xf]
        %v242 = vld [vmem:[#allocation7 + $0x10] sm:$0xf]
        %v243 = vld [vmem:[#allocation7 + $0x14] sm:$0xf]
        %v244 = vld [vmem:[#allocation7 + $0x18] sm:$0xf]
        %v245 = vld [vmem:[#allocation7 + $0x1c] sm:$0xf]
        %v246 = vld [vmem:[#allocation7 + $0x20] sm:$0xf]
        %v247 = vld [vmem:[#allocation7 + $0x24] sm:$0xf]
        %v248 = vld [vmem:[#allocation7 + $0x28] sm:$0xf]
        %v249 = vld [vmem:[#allocation7 + $0x2c] sm:$0xf]
        %v250 = vld [vmem:[#allocation7 + $0x30] sm:$0xf]
        %v251 = vld [vmem:[#allocation7 + $0x34] sm:$0xf]
        %v252 = vld [vmem:[#allocation7 + $0x38] sm:$0xf]
        %v253 = vld [vmem:[#allocation7 + $0x3c] sm:$0xf]
        %v254 = vlaneseq
        %v255 = vshrl.u32 %v254, 7
        %v256 = vsub.s32 0, %v255
        %v257 = vrot.slane %v236, %v256
        %v261 = vunpack.c.l.b16 %v233
        %v262 = vunpack.c.l.b16 %v234
        %v263 = vunpack.c.l.b16 %v235
        %v264 = vpack.c.b16 %v262, %v261
        %v265 = vpack.c.b16 %v263, %v263
        %v284 = vunpack.c.l.b16 %v238
        %v285 = vunpack.c.l.b16 %v239
        %v286 = vunpack.c.l.b16 %v240
        %v287 = vunpack.c.l.b16 %v241
        %v288 = vunpack.c.l.b16 %v242
        %v289 = vunpack.c.l.b16 %v243
        %v290 = vunpack.c.l.b16 %v244
        %v291 = vunpack.c.l.b16 %v245
        %v292 = vunpack.c.l.b16 %v246
        %v293 = vunpack.c.l.b16 %v247
        %v294 = vunpack.c.l.b16 %v248
        %v295 = vunpack.c.l.b16 %v249
        %v296 = vunpack.c.l.b16 %v250
        %v297 = vunpack.c.l.b16 %v251
        %v298 = vunpack.c.l.b16 %v252
        %v299 = vunpack.c.l.b16 %v253
        %v300 = vpack.c.b16 %v285, %v284
        %v301 = vpack.c.b16 %v287, %v286
        %v302 = vpack.c.b16 %v289, %v288
        %v303 = vpack.c.b16 %v291, %v290
        %v304 = vpack.c.b16 %v293, %v292
        %v305 = vpack.c.b16 %v295, %v294
        %v306 = vpack.c.b16 %v297, %v296
        %v307 = vpack.c.b16 %v299, %v298
        %316 = vmatprep.subr.bf16.mxu0 0
        %317 = vmatpush1.bf16.msra.mxu0 %v300
        %318 = vmatprep.subr.bf16.mxu0 0
        %319 = vmatpush1.bf16.msra.mxu0 %v301
        %320 = vmatprep.subr.bf16.mxu0 0
        %321 = vmatpush1.bf16.msra.mxu0 %v302
        %322 = vmatprep.subr.bf16.mxu0 0
        %323 = vmatpush1.bf16.msra.mxu0 %v303
        %324 = vmatprep.subr.bf16.mxu0 0
        %325 = vmatpush1.bf16.msra.mxu0 %v304
        %326 = vmatprep.subr.bf16.mxu0 0
        %327 = vmatpush1.bf16.msra.mxu0 %v305
        %328 = vmatprep.subr.bf16.mxu0 0
        %329 = vmatpush1.bf16.msra.mxu0 %v306
        %330 = vmatprep.subr.bf16.mxu0 0
        %331 = vmatpush1.bf16.msra.mxu0 %v307
        %332 = vmatprep.subr.bf16.mxu0 0
        %333 = vmatpush1.bf16.msra.mxu0 0
        %334 = vmatprep.subr.bf16.mxu0 0
        %335 = vmatpush1.bf16.msra.mxu0 0
        %336 = vmatprep.subr.bf16.mxu0 0
        %337 = vmatpush1.bf16.msra.mxu0 0
        %338 = vmatprep.subr.bf16.mxu0 0
        %339 = vmatpush1.bf16.msra.mxu0 0
        %340 = vmatprep.subr.bf16.mxu0 0
        %341 = vmatpush1.bf16.msra.mxu0 0
        %342 = vmatprep.subr.bf16.mxu0 0
        %343 = vmatpush1.bf16.msra.mxu0 0
        %344 = vmatprep.subr.bf16.mxu0 0
        %345 = vmatpush1.bf16.msra.mxu0 0
        %346 = vmatprep.subr.bf16.mxu0 0
        %347 = vmatpush1.bf16.msra.mxu0 0
        %348 = vmatprep.mubr.bf16.mxu0 0
        %349 = vmatmul.mubr.bf16.gmra.mrb[0].mxu0 %v264
        %v350 = vpop.f32.mrb[0].mxu0
        %v351 = vadd.f32 %v257, %v350
        %v352 = vpop.f32.mrb[0].mxu0
        %v353 = vpop.f32.mrb[0].mxu0
        %v354 = vadd.f32 %v257, %v353
        %v355 = vpop.f32.mrb[0].mxu0
        %356 = vmatprep.mubr.bf16.mxu0 0
        %357 = vmatmul.mubr.bf16.gmra.mrb[0].mxu0 %v265
        %v358 = vpop.f32.mrb[0].mxu0
        %v359 = vadd.f32 %v257, %v358
        %v360 = vpop.f32.mrb[0].mxu0
        %v361 = vpop.f32.mrb[0].mxu0
        %v362 = vpop.f32.mrb[0].mxu0
        %363 = vdwg.mxu0
        %vm364 = vcmp.lt.s32.totalorder %v225, 16
        %vm365 = vcmp.lt.s32.totalorder %v226, 16
        %vm366 = vcmp.lt.s32.totalorder %v227, 16
        %v367 = vsel %vm364, 1, 0
        %v368 = vsel %vm365, 1, 0
        %v369 = vsel %vm366, 1, 0
        %vm370 = vcmp.eq.s32.totalorder %v367, 1
        %vm371 = vcmp.eq.s32.totalorder %v368, 1
        %vm372 = vcmp.eq.s32.totalorder %v369, 1
        %v373 = vsel %vm370, %v351, 0.0
        %v374 = vsel %vm371, %v354, 0.0
        %v375 = vsel %vm372, %v359, 0.0
        %v376 = vrot.slane %v373, 6
        %v377 = vrot.slane %v374, 6
        %v378 = vrot.slane %v375, 6
        %vm379 = vcmp.lt.s32.totalorder %v225, 2
        %v380 = vsel %vm379, %v377, %v378
        %v381 = vsel %vm379, %v376, %v377
        %v382 = vsel %vm379, %v378, %v376
        %v383 = vlaneseq
        %v384 = vshrl.u32 %v383, 7
        %v385 = vsub.s32 4, %v384
        %v386 = vrot.slane %v236, %v385
        %v387 = vmul.f32 %v382, %v386
        %v388 = vmul.f32 %v381, %v386
        %v389 = vmul.f32 %v380, %v386
        %v390 = vrot.slane %v373, 7
        %v391 = vrot.slane %v374, 7
        %v392 = vrot.slane %v375, 7
        %vm393 = vcmp.lt.s32.totalorder %v225, 1
        %v394 = vsel %vm393, %v391, %v392
        %v395 = vsel %vm393, %v390, %v391
        %v396 = vsel %vm393, %v392, %v390
        %v397 = vlaneseq
        %v398 = vshrl.u32 %v397, 7
        %v399 = vsub.s32 5, %v398
        %v400 = vrot.slane %v236, %v399
        %v401 = vmul.f32 %v396, %v400
        %v402 = vmul.f32 %v395, %v400
        %v403 = vmul.f32 %v394, %v400
        %v404 = vadd.f32 %v387, %v401
        %v405 = vadd.f32 %v388, %v402
        %v406 = vadd.f32 %v389, %v403
        %v407 = vlaneseq
        %v408 = vshrl.u32 %v407, 7
        %v409 = vsub.s32 6, %v408
        %v410 = vrot.slane %v236, %v409
        %v411 = vmul.f32 %v373, %v410
        %v412 = vmul.f32 %v374, %v410
        %v413 = vmul.f32 %v375, %v410
        %v414 = vadd.f32 %v404, %v411
        %v415 = vadd.f32 %v405, %v412
        %v416 = vadd.f32 %v406, %v413
        %v417 = vrot.slane %v373, 1
        %v418 = vrot.slane %v374, 1
        %v419 = vrot.slane %v375, 1
        %vm420 = vcmp.lt.s32.totalorder %v225, 7
        %v421 = vsel %vm420, %v418, %v419
        %v422 = vsel %vm420, %v417, %v418
        %v423 = vsel %vm420, %v419, %v417
        %v424 = vlaneseq
        %v425 = vshrl.u32 %v424, 7
        %v426 = vsub.s32 7, %v425
        %v427 = vrot.slane %v236, %v426
        %v428 = vmul.f32 %v422, %v427
        %v429 = vmul.f32 %v421, %v427
        %v430 = vmul.f32 %v423, %v427
        %v431 = vadd.f32 %v414, %v428
        %v432 = vadd.f32 %v415, %v429
        %v433 = vadd.f32 %v416, %v430
        %v434 = vrot.slane %v373, 2
        %v435 = vrot.slane %v374, 2
        %v436 = vrot.slane %v375, 2
        %vm437 = vcmp.lt.s32.totalorder %v225, 6
        %v438 = vsel %vm437, %v435, %v436
        %v439 = vsel %vm437, %v434, %v435
        %v440 = vsel %vm437, %v436, %v434
        %v441 = vlaneseq
        %v442 = vshrl.u32 %v441, 7
        %v443 = vsub.s32 0, %v442
        %v444 = vrot.slane %v237, %v443
        %v445 = vmul.f32 %v439, %v444
        %v446 = vmul.f32 %v438, %v444
        %v447 = vmul.f32 %v440, %v444
        %v448 = vadd.f32 %v431, %v445
        %v449 = vadd.f32 %v432, %v446
        %v450 = vadd.f32 %v433, %v447
        %v451 = vlaneseq
        %v452 = vshrl.u32 %v451, 7
        %v453 = vsub.s32 1, %v452
        %v454 = vrot.slane %v236, %v453
        %v455 = vadd.f32 %v448, %v454
        %v456 = vadd.f32 %v449, %v454
        %v457 = vadd.f32 %v450, %v454
        %vm458 = vcmp.ge.f32.partialorder %v455, 0.0
        %vm459 = vcmp.ge.f32.partialorder %v456, 0.0
        %vm460 = vcmp.ge.f32.partialorder %v457, 0.0
        %v461 = vmul.f32 %v455, 0.3
        %v462 = vmul.f32 %v456, 0.3
        %v463 = vmul.f32 %v457, 0.3
        %v464 = vsel %vm458, %v455, %v461
        %v465 = vsel %vm459, %v456, %v462
        %v466 = vsel %vm460, %v457, %v463
        %v467 = vmul.f32 %v464, %v232
        %v468 = vmul.f32 %v465, %v232
        %v469 = vmul.f32 %v466, %v232
        %470 = vadd.xlane.f32.xlu0 %v467
        %v471 = vpop.xlane.xlu0 %470
        %472 = vadd.xlane.f32.xlu0 %v468
        %v473 = vpop.xlane.xlu0 %472
        %474 = vadd.xlane.f32.xlu0 %v469
        %v475 = vpop.xlane.xlu0 %474
        %v476 = vmul.f32 %v471, 0.03125
        %v477 = vmul.f32 %v473, 0.03125
        %v478 = vmul.f32 %v475, 0.03125
        %v479 = vsub.f32 %v464, %v476
        %v480 = vsub.f32 %v465, %v477
        %v481 = vsub.f32 %v466, %v478
        %v482 = vmul.f32 %v479, %v232
        %v483 = vmul.f32 %v480, %v232
        %v484 = vmul.f32 %v481, %v232
        %v485 = vmul.f32 %v482, %v482
        %v486 = vmul.f32 %v483, %v483
        %v487 = vmul.f32 %v484, %v484
        %488 = vadd.xlane.f32.xlu0 %v485
        %v489 = vpop.xlane.xlu0 %488
        %490 = vadd.xlane.f32.xlu0 %v486
        %v491 = vpop.xlane.xlu0 %490
        %492 = vadd.xlane.f32.xlu0 %v487
        %v493 = vpop.xlane.xlu0 %492
        %v494 = vmul.f32 %v489, 0.03125
        %v495 = vmul.f32 %v491, 0.03125
        %v496 = vmul.f32 %v493, 0.03125
        %v497 = vadd.f32 %v494, 1e-05
        %v498 = vadd.f32 %v495, 1e-05
        %v499 = vadd.f32 %v496, 1e-05
        %v500 = vrsqrt.pop %v497
        %v501 = vrsqrt.pop %v498
        %v502 = vrsqrt.pop %v499
        %v503 = vmul.f32 %v482, %v500
        %v504 = vmul.f32 %v483, %v501
        %v505 = vmul.f32 %v484, %v502
        %v506 = vlaneseq
        %v507 = vshrl.u32 %v506, 7
        %v508 = vsub.s32 2, %v507
        %v509 = vrot.slane %v236, %v508
        %v510 = vmul.f32 %v503, %v509
        %v511 = vmul.f32 %v504, %v509
        %v512 = vmul.f32 %v505, %v509
        %v513 = vlaneseq
        %v514 = vshrl.u32 %v513, 7
        %v515 = vsub.s32 3, %v514
        %v516 = vrot.slane %v236, %v515
        %v517 = vadd.f32 %v510, %v516
        %v518 = vadd.f32 %v511, %v516
        %v519 = vadd.f32 %v512, %v516
        %s520 = scalar_lea.vmem [#allocation9], 16
        %v521 = vld [vmem:[%s520] sm:$0xff]
        %v522 = vld [vmem:[%s520 + $0x8] sm:$0xff]
        %v523 = vpack.c.bf16 %v518, %v517
        %v524 = vpack.c.bf16 %v519, %v519
        %s525 = scalar_lea.vmem [#allocation7], 64
        %v526 = vld [vmem:[%s525] sm:$0xf]
        %v527 = vld [vmem:[%s525 + $0x4] sm:$0xf]
        %v528 = vld [vmem:[%s525 + $0x8] sm:$0xf]
        %v529 = vld [vmem:[%s525 + $0xc] sm:$0xf]
        %v530 = vld [vmem:[%s525 + $0x10] sm:$0xf]
        %v531 = vld [vmem:[%s525 + $0x14] sm:$0xf]
        %v532 = vld [vmem:[%s525 + $0x18] sm:$0xf]
        %v533 = vld [vmem:[%s525 + $0x1c] sm:$0xf]
        %v534 = vld [vmem:[%s525 + $0x20] sm:$0xf]
        %v535 = vld [vmem:[%s525 + $0x24] sm:$0xf]
        %v536 = vld [vmem:[%s525 + $0x28] sm:$0xf]
        %v537 = vld [vmem:[%s525 + $0x2c] sm:$0xf]
        %v538 = vld [vmem:[%s525 + $0x30] sm:$0xf]
        %v539 = vld [vmem:[%s525 + $0x34] sm:$0xf]
        %v540 = vld [vmem:[%s525 + $0x38] sm:$0xf]
        %v541 = vld [vmem:[%s525 + $0x3c] sm:$0xf]
        %v542 = vlaneseq
        %v543 = vshrl.u32 %v542, 7
        %v544 = vsub.s32 0, %v543
        %v545 = vrot.slane %v521, %v544
        %v562 = vunpack.c.l.b16 %v526
        %v563 = vunpack.c.l.b16 %v527
        %v564 = vunpack.c.l.b16 %v528
        %v565 = vunpack.c.l.b16 %v529
        %v566 = vunpack.c.l.b16 %v530
        %v567 = vunpack.c.l.b16 %v531
        %v568 = vunpack.c.l.b16 %v532
        %v569 = vunpack.c.l.b16 %v533
        %v570 = vunpack.c.l.b16 %v534
        %v571 = vunpack.c.l.b16 %v535
        %v572 = vunpack.c.l.b16 %v536
        %v573 = vunpack.c.l.b16 %v537
        %v574 = vunpack.c.l.b16 %v538
        %v575 = vunpack.c.l.b16 %v539
        %v576 = vunpack.c.l.b16 %v540
        %v577 = vunpack.c.l.b16 %v541
        %v578 = vpack.c.b16 %v563, %v562
        %v579 = vpack.c.b16 %v565, %v564
        %v580 = vpack.c.b16 %v567, %v566
        %v581 = vpack.c.b16 %v569, %v568
        %v582 = vpack.c.b16 %v571, %v570
        %v583 = vpack.c.b16 %v573, %v572
        %v584 = vpack.c.b16 %v575, %v574
        %v585 = vpack.c.b16 %v577, %v576
        %594 = vmatprep.subr.bf16.mxu0 0
        %595 = vmatpush1.bf16.msra.mxu0 %v578
        %596 = vmatprep.subr.bf16.mxu0 0
        %597 = vmatpush1.bf16.msra.mxu0 %v579
        %598 = vmatprep.subr.bf16.mxu0 0
        %599 = vmatpush1.bf16.msra.mxu0 %v580
        %600 = vmatprep.subr.bf16.mxu0 0
        %601 = vmatpush1.bf16.msra.mxu0 %v581
        %602 = vmatprep.subr.bf16.mxu0 0
        %603 = vmatpush1.bf16.msra.mxu0 %v582
        %604 = vmatprep.subr.bf16.mxu0 0
        %605 = vmatpush1.bf16.msra.mxu0 %v583
        %606 = vmatprep.subr.bf16.mxu0 0
        %607 = vmatpush1.bf16.msra.mxu0 %v584
        %608 = vmatprep.subr.bf16.mxu0 0
        %609 = vmatpush1.bf16.msra.mxu0 %v585
        %610 = vmatprep.subr.bf16.mxu0 0
        %611 = vmatpush1.bf16.msra.mxu0 0
        %612 = vmatprep.subr.bf16.mxu0 0
        %613 = vmatpush1.bf16.msra.mxu0 0
        %614 = vmatprep.subr.bf16.mxu0 0
        %615 = vmatpush1.bf16.msra.mxu0 0
        %616 = vmatprep.subr.bf16.mxu0 0
        %617 = vmatpush1.bf16.msra.mxu0 0
        %618 = vmatprep.subr.bf16.mxu0 0
        %619 = vmatpush1.bf16.msra.mxu0 0
        %620 = vmatprep.subr.bf16.mxu0 0
        %621 = vmatpush1.bf16.msra.mxu0 0
        %622 = vmatprep.subr.bf16.mxu0 0
        %623 = vmatpush1.bf16.msra.mxu0 0
        %624 = vmatprep.subr.bf16.mxu0 0
        %625 = vmatpush1.bf16.msra.mxu0 0
        %626 = vmatprep.mubr.bf16.mxu0 0
        %627 = vmatmul.mubr.bf16.gmra.mrb[0].mxu0 %v523
        %v628 = vpop.f32.mrb[0].mxu0
        %v629 = vadd.f32 %v545, %v628
        %v630 = vpop.f32.mrb[0].mxu0
        %v631 = vpop.f32.mrb[0].mxu0
        %v632 = vadd.f32 %v545, %v631
        %v633 = vpop.f32.mrb[0].mxu0
        %634 = vmatprep.mubr.bf16.mxu0 0
        %635 = vmatmul.mubr.bf16.gmra.mrb[0].mxu0 %v524
        %v636 = vpop.f32.mrb[0].mxu0
        %v637 = vadd.f32 %v545, %v636
        %v638 = vpop.f32.mrb[0].mxu0
        %v639 = vpop.f32.mrb[0].mxu0
        %v640 = vpop.f32.mrb[0].mxu0
        %641 = vdwg.mxu0
        %v642 = vsel %vm370, %v629, 0.0
        %v643 = vsel %vm371, %v632, 0.0
        %v644 = vsel %vm372, %v637, 0.0
        %v645 = vrot.slane %v642, 6
        %v646 = vrot.slane %v643, 6
        %v647 = vrot.slane %v644, 6
        %v648 = vsel %vm379, %v646, %v647
        %v649 = vsel %vm379, %v645, %v646
        %v650 = vsel %vm379, %v647, %v645
        %v651 = vlaneseq
        %v652 = vshrl.u32 %v651, 7
        %v653 = vsub.s32 4, %v652
        %v654 = vrot.slane %v521, %v653
        %v655 = vmul.f32 %v650, %v654
        %v656 = vmul.f32 %v649, %v654
        %v657 = vmul.f32 %v648, %v654
        %v658 = vrot.slane %v642, 7
        %v659 = vrot.slane %v643, 7
        %v660 = vrot.slane %v644, 7
        %v661 = vsel %vm393, %v659, %v660
        %v662 = vsel %vm393, %v658, %v659
        %v663 = vsel %vm393, %v660, %v658
        %v664 = vlaneseq
        %v665 = vshrl.u32 %v664, 7
        %v666 = vsub.s32 5, %v665
        %v667 = vrot.slane %v521, %v666
        %v668 = vmul.f32 %v663, %v667
        %v669 = vmul.f32 %v662, %v667
        %v670 = vmul.f32 %v661, %v667
        %v671 = vadd.f32 %v655, %v668
        %v672 = vadd.f32 %v656, %v669
        %v673 = vadd.f32 %v657, %v670
        %v674 = vlaneseq
        %v675 = vshrl.u32 %v674, 7
        %v676 = vsub.s32 6, %v675
        %v677 = vrot.slane %v521, %v676
        %v678 = vmul.f32 %v642, %v677
        %v679 = vmul.f32 %v643, %v677
        %v680 = vmul.f32 %v644, %v677
        %v681 = vadd.f32 %v671, %v678
        %v682 = vadd.f32 %v672, %v679
        %v683 = vadd.f32 %v673, %v680
        %v684 = vrot.slane %v642, 1
        %v685 = vrot.slane %v643, 1
        %v686 = vrot.slane %v644, 1
        %v687 = vsel %vm420, %v685, %v686
        %v688 = vsel %vm420, %v684, %v685
        %v689 = vsel %vm420, %v686, %v684
        %v690 = vlaneseq
        %v691 = vshrl.u32 %v690, 7
        %v692 = vsub.s32 7, %v691
        %v693 = vrot.slane %v521, %v692
        %v694 = vmul.f32 %v688, %v693
        %v695 = vmul.f32 %v687, %v693
        %v696 = vmul.f32 %v689, %v693
        %v697 = vadd.f32 %v681, %v694
        %v698 = vadd.f32 %v682, %v695
        %v699 = vadd.f32 %v683, %v696
        %v700 = vrot.slane %v642, 2
        %v701 = vrot.slane %v643, 2
        %v702 = vrot.slane %v644, 2
        %v703 = vsel %vm437, %v701, %v702
        %v704 = vsel %vm437, %v700, %v701
        %v705 = vsel %vm437, %v702, %v700
        %v706 = vlaneseq
        %v707 = vshrl.u32 %v706, 7
        %v708 = vsub.s32 0, %v707
        %v709 = vrot.slane %v522, %v708
        %v710 = vmul.f32 %v704, %v709
        %v711 = vmul.f32 %v703, %v709
        %v712 = vmul.f32 %v705, %v709
        %v713 = vadd.f32 %v697, %v710
        %v714 = vadd.f32 %v698, %v711
        %v715 = vadd.f32 %v699, %v712
        %v716 = vlaneseq
        %v717 = vshrl.u32 %v716, 7
        %v718 = vsub.s32 1, %v717
        %v719 = vrot.slane %v521, %v718
        %v720 = vadd.f32 %v713, %v719
        %v721 = vadd.f32 %v714, %v719
        %v722 = vadd.f32 %v715, %v719
        %vm723 = vcmp.ge.f32.partialorder %v720, 0.0
        %vm724 = vcmp.ge.f32.partialorder %v721, 0.0
        %vm725 = vcmp.ge.f32.partialorder %v722, 0.0
        %v726 = vmul.f32 %v720, 0.3
        %v727 = vmul.f32 %v721, 0.3
        %v728 = vmul.f32 %v722, 0.3
        %v729 = vsel %vm723, %v720, %v726
        %v730 = vsel %vm724, %v721, %v727
        %v731 = vsel %vm725, %v722, %v728
        %v732 = vmul.f32 %v729, %v232
        %v733 = vmul.f32 %v730, %v232
        %v734 = vmul.f32 %v731, %v232
        %735 = vadd.xlane.f32.xlu0 %v732
        %v736 = vpop.xlane.xlu0 %735
        %737 = vadd.xlane.f32.xlu0 %v733
        %v738 = vpop.xlane.xlu0 %737
        %739 = vadd.xlane.f32.xlu0 %v734
        %v740 = vpop.xlane.xlu0 %739
        %v741 = vmul.f32 %v736, 0.03125
        %v742 = vmul.f32 %v738, 0.03125
        %v743 = vmul.f32 %v740, 0.03125
        %v744 = vsub.f32 %v729, %v741
        %v745 = vsub.f32 %v730, %v742
        %v746 = vsub.f32 %v731, %v743
        %v747 = vmul.f32 %v744, %v232
        %v748 = vmul.f32 %v745, %v232
        %v749 = vmul.f32 %v746, %v232
        %v750 = vmul.f32 %v747, %v747
        %v751 = vmul.f32 %v748, %v748
        %v752 = vmul.f32 %v749, %v749
        %753 = vadd.xlane.f32.xlu0 %v750
        %v754 = vpop.xlane.xlu0 %753
        %755 = vadd.xlane.f32.xlu0 %v751
        %v756 = vpop.xlane.xlu0 %755
        %757 = vadd.xlane.f32.xlu0 %v752
        %v758 = vpop.xlane.xlu0 %757
        %v759 = vmul.f32 %v754, 0.03125
        %v760 = vmul.f32 %v756, 0.03125
        %v761 = vmul.f32 %v758, 0.03125
        %v762 = vadd.f32 %v759, 1e-05
        %v763 = vadd.f32 %v760, 1e-05
        %v764 = vadd.f32 %v761, 1e-05
        %v765 = vrsqrt.pop %v762
        %v766 = vrsqrt.pop %v763
        %v767 = vrsqrt.pop %v764
        %v768 = vmul.f32 %v747, %v765
        %v769 = vmul.f32 %v748, %v766
        %v770 = vmul.f32 %v749, %v767
        %v771 = vlaneseq
        %v772 = vshrl.u32 %v771, 7
        %v773 = vsub.s32 2, %v772
        %v774 = vrot.slane %v521, %v773
        %v775 = vmul.f32 %v768, %v774
        %v776 = vmul.f32 %v769, %v774
        %v777 = vmul.f32 %v770, %v774
        %v778 = vlaneseq
        %v779 = vshrl.u32 %v778, 7
        %v780 = vsub.s32 3, %v779
        %v781 = vrot.slane %v521, %v780
        %v782 = vadd.f32 %v775, %v781
        %v783 = vadd.f32 %v776, %v781
        %v784 = vadd.f32 %v777, %v781
        %s785 = sld [smem:[#allocation3 + %s26]]
        %v786 = vstv %s785
        %vm787 = vcmp.lt.s32.totalorder %v225, %v786
        %vm788 = vcmp.lt.s32.totalorder %v226, %v786
        %vm789 = vcmp.lt.s32.totalorder %v227, %v786
        %v790 = vsel %vm787, 1, 0
        %v791 = vsel %vm788, 1, 0
        %v792 = vsel %vm789, 1, 0
        %vm793 = vcmp.eq.s32.totalorder %v790, 1
        %vm794 = vcmp.eq.s32.totalorder %v791, 1
        %vm795 = vcmp.eq.s32.totalorder %v792, 1
        %v796 = vsel %vm793, %v782, 0.0
        %v797 = vsel %vm794, %v783, 0.0
        %v798 = vsel %vm795, %v784, 0.0
        %v799 = vpack.c.bf16 %v797, %v796
        %v800 = vpack.c.bf16 %v798, %v798
        %v803 = vunpack.c.l.b16 %v799
        %v804 = vunpack.c.h.b16 %v799
        %v805 = vunpack.c.l.b16 %v800
        %v806 = vpack.c.b16 %v803, %v803
        %v807 = vpack.c.b16 %v804, %v804
        %v808 = vpack.c.b16 %v805, %v805
        %812 = vst [vmem:[%s222] sm:$0xf] %v806
        %813 = vst [vmem:[%s222 + $0x4] sm:$0xf] %v807
        %814 = vst [vmem:[%s222 + $0x8] sm:$0xf] %v808
        %s815 = sand.u32 %s102, 1
        %s816 = scalar_lea.sflag [#allocation6], %s815
        %s817 = sand.u32 %s102, 1
        %s818 = smul.addr %s817, 12
        %s819 = scalar_lea.vmem [#allocation10], %s818
        // Predicated region
        $region45: #{tpu_custom_call.1} parent=31 // pred_check
          %p820 = pneg %p112
        $region46: #{tpu_custom_call.1} parent=31 // pred_check_branch
          %822 = sbr.rel (%p820) target = $region48
        $region47: #{tpu_custom_call.1} parent=31 // pred_region
          %s824 = ssub.s32 192, 192
          %825 = vsyncadd %s816, %s824
          %s826 = smul.addr %s26, 3
          %s827 = smul.addr %s826, 64
          %s828 = scalar_lea.hbm %s4, %s827
          %s829 = sshll.u32 %s819, 4
          %s830 = int_to_ptr.vmem [resolvable:$true] %s829
          %835 = dma.vmem_to_hbm [thread:$0]  %s830, 192, %s828, %s816, 64, 64, 4
        $region48: #{tpu_custom_call.1} parent=31 // pred_fallthru
          _
      $region32: #{tpu_custom_call.1} parent=5 // pred_fallthru
        _
      %p836 = scmp.le.s32.totalorder 2, %s21
      // Predicated region
      $region49: #{tpu_custom_call.1} parent=5 // pred_check
        %p837 = pneg %p836
      $region50: #{tpu_custom_call.1} parent=5 // pred_check_branch
        %839 = sbr.rel (%p837) target = $region52
      $region51: #{tpu_custom_call.1} parent=5 // pred_region
        %s840 = ssub.s32 %s21, 2
        // Predicated region
        $region53: #{tpu_custom_call.1} parent=51 // pred_check
          %p841 = pneg %p118
        $region54: #{tpu_custom_call.1} parent=51 // pred_check_branch
          %843 = sbr.rel (%p841) target = $region56
        $region55: #{tpu_custom_call.1} parent=51 // pred_region
          %s844 = sand.u32 %s103, 1
          %s845 = scalar_lea.sflag [#allocation6], %s844
          %s846 = sand.u32 %s103, 1
          %s847 = smul.addr %s846, 12
          %s848 = scalar_lea.vmem [#allocation10], %s847
          %849 = dma.done %s845, 192
        $region56: #{tpu_custom_call.1} parent=51 // pred_fallthru
          _
      $region52: #{tpu_custom_call.1} parent=5 // pred_fallthru
        _
    $region6: #{tpu_custom_call.1} parent=1 // loop_footer
      %s25 = sadd.s32 1, %s21
    $region7: #{tpu_custom_call.1} parent=1 // loop_footer_branch
      %20 = sbr.rel target = $region3
    $region8: #{tpu_custom_call.1} parent=1 // loop_exit
      _
    %850 = vsyncpa [#allocation5], 1
    %s851 = scalar_lea.sflag [#allocation5], 1
    %852 = vsyncpa %s851, 1
    %853 = vsyncpa [#allocation8], 1
    %854 = vsyncpa [#allocation6], 1
    %s855 = scalar_lea.sflag [#allocation6], 1
    %856 = vsyncpa %s855, 1

</llo_original>
